<compile_context>
chip_gen: v5e
topology: v5e:2x2
jax: 0.10.0
libtpu: 0.0.40
codegen_flags: <defaults>
</compile_context>

<pallas_src>
import functools

import jax
import jax.numpy as jnp
from jax import lax
from jax.experimental import pallas as pl
from jax.experimental.pallas import tpu as pltpu


def transformer_block_kernel(
    q_ref, k_ref, v_ref, mask_ref,
    wq_ref, bq_ref, wk_ref, bk_ref, wv_ref, bv_ref, wo_ref, bo_ref,
    g1_ref, be1_ref, g2_ref, be2_ref,
    w1_ref, bf1_ref, w2_ref, bf2_ref,
    out_ref,
    x_scr, xb_scr, ff_scr, ctx_scr,
    *, n_head, bt, eps=1e-5,
):
    f = pl.program_id(1)
    nf = pl.num_programs(1)
    _, S, E = q_ref.shape
    Dh = E // n_head
    rows = bt * S
    bf16 = jnp.bfloat16

    # ---------------- attention + residual + LayerNorm1 (once per batch tile)
    @pl.when(f == 0)
    def _attention_and_norm1():
        xq = q_ref[...].reshape(rows, E)
        xk = k_ref[...].reshape(rows, E)
        xv = v_ref[...].reshape(rows, E)

        inv_scale = 1.0 / (E ** 0.5)

        def proj(x, w_ref, b_ref):
            # weights arrive pre-cast to bf16 from the wrapper; f32 accumulate
            return jnp.dot(x.astype(bf16), w_ref[...],
                           preferred_element_type=jnp.float32) + b_ref[0]

        # Fold 1/sqrt(E) into Q once; keep batched (bt, S, E) bf16 operands.
        Qb = (proj(xq, wq_ref, bq_ref) * inv_scale).astype(bf16).reshape(bt, S, E)
        Kb = proj(xk, wk_ref, bk_ref).astype(bf16).reshape(bt, S, E)
        Vb = proj(xv, wv_ref, bv_ref).astype(bf16).reshape(bt, S, E)

        # Hoisted additive mask (scale folded in, matching the folded Q scale).
        neg_mask = (mask_ref[...] * (-1e9 * inv_scale))[None, :, :]   # (1,S,S)

        # Single short head loop; the batch dim rides the dot_general batch
        # axis, and per-head context is staged to VMEM (bounded live ranges).
        for h in range(n_head):
            c0 = h * Dh
            qh = Qb[:, :, c0:c0 + Dh]
            kh = Kb[:, :, c0:c0 + Dh]
            vh = Vb[:, :, c0:c0 + Dh]
            score = jnp.einsum("bqd,bkd->bqk", qh, kh,
                               preferred_element_type=jnp.float32)     # (bt,S,S)
            score = score + neg_mask
            score = score - jnp.max(score, axis=-1, keepdims=True)
            p = jnp.exp(score)
            p = p * pl.reciprocal(jnp.sum(p, axis=-1, keepdims=True),
                                  approx=True)                          # EUP slot
            ctx = jnp.einsum("bqk,bkd->bqd", p.astype(bf16), vh,
                             preferred_element_type=jnp.float32)        # (bt,S,Dh)
            # Head-concat realized by the staging write at lane offset h*Dh.
            ctx_scr[:, :, c0:c0 + Dh] = ctx.astype(bf16)

        # One large o-projection (contraction K = E) instead of n_head K = Dh
        # matmuls — full MXU depth utilization.
        attn = jnp.dot(ctx_scr[...].reshape(rows, E), wo_ref[...],
                       preferred_element_type=jnp.float32)

        # Loop-invariant broadcasts read once (JAX does not CSE them).
        bo = bo_ref[0]
        g1 = g1_ref[0]
        be1 = be1_ref[0]

        # o_dense bias + residual (dropout = identity in eval mode), LayerNorm1.
        h1 = attn + bo + xq
        mu = jnp.mean(h1, axis=-1, keepdims=True)
        var = jnp.mean((h1 - mu) ** 2, axis=-1, keepdims=True)
        xn = (h1 - mu) * lax.rsqrt(var + eps) * g1 + be1
        x_scr[...] = xn                     # f32 copy kept for the LN2 residual
        xb_scr[...] = xn.astype(bf16)       # bf16 copy reused on every F step

    # ---------------- feed forward: one F-tile per grid step, accumulated
    xb = xb_scr[...]                                        # already bf16
    hdn = jnp.dot(xb, w1_ref[...],
                  preferred_element_type=jnp.float32) + bf1_ref[0]
    hdn = jnp.maximum(hdn, 0.0)
    contrib = jnp.dot(hdn.astype(bf16), w2_ref[...],
                      preferred_element_type=jnp.float32)

    @pl.when(f == 0)
    def _ff_init():                       # first tile stores directly: no
        ff_scr[...] = contrib             # zero-fill pass over ff_scr needed

    @pl.when(f > 0)
    def _ff_acc():
        ff_scr[...] += contrib

    # ---------------- residual + LayerNorm2 + writeback (last F-tile)
    @pl.when(f == nf - 1)
    def _norm2_and_write():
        g2 = g2_ref[0]
        be2 = be2_ref[0]
        h2 = ff_scr[...] + bf2_ref[0] + x_scr[...]
        mu = jnp.mean(h2, axis=-1, keepdims=True)
        var = jnp.mean((h2 - mu) ** 2, axis=-1, keepdims=True)
        out = (h2 - mu) * lax.rsqrt(var + eps) * g2 + be2
        out_ref[...] = out.reshape(out_ref.shape).astype(out_ref.dtype)


def transformer_block(query, key, value, mask, params, n_head, *,
                      rows_target=256, f_tile_target=512,
                      vmem_limit_bytes=48 * 1024 * 1024,
                      out_dtype=jnp.float32):
    """Pallas TransformerBlock forward.  Expects Linear weights pre-transposed
    to (in, out) so the kernel computes y = x @ W + b (PyTorch y = x @ W.T + b).

    NOTE: for best lane utilization on real models, embed_size and the FFN
    hidden dim should be multiples of 128 (the demo uses the module's small
    shapes as-is; block last-dims equal the full array dims, which is valid).
    `out_dtype=jnp.bfloat16` halves output writeback traffic if the caller can
    accept a bf16 result."""
    B, S, E = query.shape
    Fdim = params["w1"].shape[1]
    assert E % n_head == 0, "embed_size must be divisible by heads"

    # Fold enough batch elements into one grid step that the matmul M
    # dimension (bt*S) is large enough to make the FFN weight streaming pay
    # (rows_target ~256 keeps the FFN closer to compute-bound on all gens).
    bt = min(B, max(1, rows_target // max(S, 1)))
    while B % bt:
        bt -= 1
    rows = bt * S

    # FFN hidden-dim tile: keeps only (E, tf) + (tf, E) weight slices resident
    # per step (bounded VMEM on v7x; also enables weight pipelining over f).
    if Fdim <= f_tile_target or Fdim % 128 != 0:
        tf = Fdim
    else:
        tf = 128
        cand = (f_tile_target // 128) * 128
        while cand >= 128:
            if Fdim % cand == 0:
                tf = cand
                break
            cand -= 128
    nf = Fdim // tf

    # bf16 weights: MXU-native dtype on all generations, halves weight traffic.
    # Biases / LayerNorm params stay f32 (added after f32 accumulation).
    wdt = jnp.bfloat16
    wq, wk, wv, wo = (params[k].astype(wdt) for k in ("wq", "wk", "wv", "wo"))
    w1, w2 = params["w1"].astype(wdt), params["w2"].astype(wdt)

    kernel = functools.partial(transformer_block_kernel, n_head=n_head, bt=bt)

    act_spec = pl.BlockSpec((bt, S, E), lambda b, f: (b, 0, 0))

    def const(shape):
        return pl.BlockSpec(shape, lambda b, f: (0,) * len(shape))

    in_specs = [
        act_spec, act_spec, act_spec,                  # query, key, value
        const((S, S)),                                 # mask
        const((E, E)), const((1, E)),                  # wq, bq
        const((E, E)), const((1, E)),                  # wk, bk
        const((E, E)), const((1, E)),                  # wv, bv
        const((E, E)), const((1, E)),                  # wo, bo
        const((1, E)), const((1, E)),                  # norm1 gamma, beta
        const((1, E)), const((1, E)),                  # norm2 gamma, beta
        pl.BlockSpec((E, tf), lambda b, f: (0, f)),    # ff w1 (F-tiled)
        pl.BlockSpec((1, tf), lambda b, f: (0, f)),    # ff b1 (F-tiled)
        pl.BlockSpec((tf, E), lambda b, f: (f, 0)),    # ff w2 (F-tiled)
        const((1, E)),                                 # ff b2
    ]

    return pl.pallas_call(
        kernel,
        out_shape=jax.ShapeDtypeStruct((B, S, E), out_dtype),
        grid=(B // bt, nf),
        in_specs=in_specs,
        out_specs=act_spec,
        scratch_shapes=[
            pltpu.VMEM((rows, E), jnp.float32),    # x_scr: norm1(attn + q), f32
            pltpu.VMEM((rows, E), jnp.bfloat16),   # xb_scr: bf16 copy for FFN
            pltpu.VMEM((rows, E), jnp.float32),    # ff_scr: FFN accumulator
            pltpu.VMEM((bt, S, E), jnp.bfloat16),  # ctx_scr: per-head context
        ],
        compiler_params=pltpu.CompilerParams(
            dimension_semantics=("parallel", "arbitrary"),
            # raise scoped VMEM above the 16/32 MiB defaults; keep headroom
            # below the 64 MiB/TC physical limit on v7x (raise to ~96 MiB on
            # v5e/v6e which have 128 MiB).
            vmem_limit_bytes=vmem_limit_bytes,
        ),
    )(
        query, key, value, mask,
        wq, params["bq"], wk, params["bk"],
        wv, params["bv"], wo, params["bo"],
        params["g1"], params["be1"], params["g2"], params["be2"],
        w1, params["bf1"], w2, params["bf2"],
    )


def _reference(query, key, value, mask, params, n_head):
    """Pure-JAX f32 reference mirroring the PyTorch forward (eval mode)."""
    B, S, E = query.shape
    Dh = E // n_head

    def lin(x, w, b):
        return x @ w + b[0]

    Q = lin(query, params["wq"], params["bq"])
    K = lin(key, params["wk"], params["bk"])
    V = lin(value, params["wv"], params["bv"])

    def split(x):
        return x.reshape(B, S, n_head, Dh).transpose(0, 2, 1, 3)

    Qh, Kh, Vh = split(Q), split(K), split(V)
    score = jnp.einsum("bhqd,bhkd->bhqk", Qh, Kh)
    score = score + mask[None, None] * (-1e9)
    attn = jax.nn.softmax(score / (E ** 0.5), axis=-1)
    ctx = jnp.einsum("bhqk,bhkd->bhqd", attn, Vh)
    ctx = ctx.transpose(0, 2, 1, 3).reshape(B, S, E)
    o = lin(ctx, params["wo"], params["bo"])

    def ln(x, g, b, eps=1e-5):
        mu = jnp.mean(x, axis=-1, keepdims=True)
        var = jnp.mean((x - mu) ** 2, axis=-1, keepdims=True)
        return (x - mu) * jax.lax.rsqrt(var + eps) * g[0] + b[0]

    x = ln(o + query, params["g1"], params["be1"])
    ff = jnp.maximum(lin(x, params["w1"], params["bf1"]), 0.0)
    ff = lin(ff, params["w2"], params["bf2"])
    return ln(ff + x, params["g2"], params["be2"])


if __name__ == "__main__":
    B, S, E = 2, 8, 32
    heads = 4
    forward_expansion = 4
    Fdim = forward_expansion * E

    key0 = jax.random.PRNGKey(0)
    ks = jax.random.split(key0, 16)

    def w(k, shape, scale=0.1):
        return (scale * jax.random.normal(k, shape)).astype(jnp.float32)

    params = {
        "wq": w(ks[0], (E, E)), "bq": w(ks[1], (1, E)),
        "wk": w(ks[2], (E, E)), "bk": w(ks[3], (1, E)),
        "wv": w(ks[4], (E, E)), "bv": w(ks[5], (1, E)),
        "wo": w(ks[6], (E, E)), "bo": w(ks[7], (1, E)),
        "g1": jnp.ones((1, E), jnp.float32), "be1": jnp.zeros((1, E), jnp.float32),
        "g2": jnp.ones((1, E), jnp.float32), "be2": jnp.zeros((1, E), jnp.float32),
        "w1": w(ks[8], (E, Fdim)), "bf1": w(ks[9], (1, Fdim)),
        "w2": w(ks[10], (Fdim, E)), "bf2": w(ks[11], (1, E)),
    }

    query = w(ks[12], (B, S, E), scale=1.0)
    key_in = w(ks[13], (B, S, E), scale=1.0)
    value = w(ks[14], (B, S, E), scale=1.0)
    # causal-style 0/1 mask (1 = masked position), broadcast over batch & heads
    mask = jnp.triu(jnp.ones((S, S), jnp.float32), k=1)

    out = transformer_block(query, key_in, value, mask, params, heads)
    out = jax.block_until_ready(out)

    ref = _reference(query, key_in, value, mask, params, heads)
    assert out.shape == (B, S, E)
    # Tolerance sized for bf16 MXU operands (weights + matmul inputs, f32
    # accumulation) vs. the pure-f32 reference.
    err = float(jnp.max(jnp.abs(out - ref)))
    assert jnp.allclose(out, ref, atol=3e-2, rtol=3e-2), f"max abs err {err}"

    print("KERNEL_OK")
</pallas_src>

<mosaic_0001>
module attributes {stable_mosaic.version = 11 : i64} {
  func.func @transformer_block_kernel(%arg0: i32, %arg1: i32, %arg2: memref<2x8x32xf32, #tpu.memory_space<vmem>>, %arg3: memref<2x8x32xf32, #tpu.memory_space<vmem>>, %arg4: memref<2x8x32xf32, #tpu.memory_space<vmem>>, %arg5: memref<8x8xf32, #tpu.memory_space<vmem>>, %arg6: memref<32x32xbf16, #tpu.memory_space<vmem>>, %arg7: memref<1x32xf32, #tpu.memory_space<vmem>>, %arg8: memref<32x32xbf16, #tpu.memory_space<vmem>>, %arg9: memref<1x32xf32, #tpu.memory_space<vmem>>, %arg10: memref<32x32xbf16, #tpu.memory_space<vmem>>, %arg11: memref<1x32xf32, #tpu.memory_space<vmem>>, %arg12: memref<32x32xbf16, #tpu.memory_space<vmem>>, %arg13: memref<1x32xf32, #tpu.memory_space<vmem>>, %arg14: memref<1x32xf32, #tpu.memory_space<vmem>>, %arg15: memref<1x32xf32, #tpu.memory_space<vmem>>, %arg16: memref<1x32xf32, #tpu.memory_space<vmem>>, %arg17: memref<1x32xf32, #tpu.memory_space<vmem>>, %arg18: memref<32x128xbf16, #tpu.memory_space<vmem>>, %arg19: memref<1x128xf32, #tpu.memory_space<vmem>>, %arg20: memref<128x32xbf16, #tpu.memory_space<vmem>>, %arg21: memref<1x32xf32, #tpu.memory_space<vmem>>, %arg22: memref<2x8x32xf32, #tpu.memory_space<vmem>>, %arg23: memref<16x32xf32, #tpu.memory_space<vmem>>, %arg24: memref<16x32xbf16, #tpu.memory_space<vmem>>, %arg25: memref<16x32xf32, #tpu.memory_space<vmem>>, %arg26: memref<2x8x32xbf16, #tpu.memory_space<vmem>>) attributes {dimension_semantics = [#tpu.dimension_semantics<parallel>, #tpu.dimension_semantics<arbitrary>], iteration_bounds = array<i64: 1, 1>, scalar_prefetch = 0 : i64, scratch_operands = 4 : i64, tpu.core_type = #tpu.core_type<tc>, window_params = [{transform_indices = @transform_0, window_bounds = array<i64: 2, 8, 32>}, {transform_indices = @transform_1, window_bounds = array<i64: 2, 8, 32>}, {transform_indices = @transform_2, window_bounds = array<i64: 2, 8, 32>}, {pipeline_mode = #tpu.pipeline_mode<synchronous>, transform_indices = @transform_3, window_bounds = array<i64: 8, 8>}, {pipeline_mode = #tpu.pipeline_mode<synchronous>, transform_indices = @transform_4, window_bounds = array<i64: 32, 32>}, {pipeline_mode = #tpu.pipeline_mode<synchronous>, transform_indices = @transform_5, window_bounds = array<i64: 1, 32>}, {pipeline_mode = #tpu.pipeline_mode<synchronous>, transform_indices = @transform_6, window_bounds = array<i64: 32, 32>}, {pipeline_mode = #tpu.pipeline_mode<synchronous>, transform_indices = @transform_7, window_bounds = array<i64: 1, 32>}, {pipeline_mode = #tpu.pipeline_mode<synchronous>, transform_indices = @transform_8, window_bounds = array<i64: 32, 32>}, {pipeline_mode = #tpu.pipeline_mode<synchronous>, transform_indices = @transform_9, window_bounds = array<i64: 1, 32>}, {pipeline_mode = #tpu.pipeline_mode<synchronous>, transform_indices = @transform_10, window_bounds = array<i64: 32, 32>}, {pipeline_mode = #tpu.pipeline_mode<synchronous>, transform_indices = @transform_11, window_bounds = array<i64: 1, 32>}, {pipeline_mode = #tpu.pipeline_mode<synchronous>, transform_indices = @transform_12, window_bounds = array<i64: 1, 32>}, {pipeline_mode = #tpu.pipeline_mode<synchronous>, transform_indices = @transform_13, window_bounds = array<i64: 1, 32>}, {pipeline_mode = #tpu.pipeline_mode<synchronous>, transform_indices = @transform_14, window_bounds = array<i64: 1, 32>}, {pipeline_mode = #tpu.pipeline_mode<synchronous>, transform_indices = @transform_15, window_bounds = array<i64: 1, 32>}, {transform_indices = @transform_16, window_bounds = array<i64: 32, 128>}, {transform_indices = @transform_17, window_bounds = array<i64: 1, 128>}, {transform_indices = @transform_18, window_bounds = array<i64: 128, 32>}, {pipeline_mode = #tpu.pipeline_mode<synchronous>, transform_indices = @transform_19, window_bounds = array<i64: 1, 32>}, {transform_indices = @transform_20, window_bounds = array<i64: 2, 8, 32>}]} {
    %c0_i32 = arith.constant 0 : i32
    %0 = arith.cmpi eq, %arg1, %c0_i32 : i32
    %1 = arith.extui %0 : i1 to i32
    %c0_i32_0 = arith.constant 0 : i32
    %2 = arith.cmpi ne, %1, %c0_i32_0 : i32
    scf.if %2 {
      %c0_16 = arith.constant 0 : index
      %c0_17 = arith.constant 0 : index
      %c0_18 = arith.constant 0 : index
      %25 = vector.load %arg2[%c0_16, %c0_17, %c0_18] : memref<2x8x32xf32, #tpu.memory_space<vmem>>, vector<2x8x32xf32>
      %26 = vector.shape_cast %25 : vector<2x8x32xf32> to vector<16x32xf32>
      %c0_19 = arith.constant 0 : index
      %c0_20 = arith.constant 0 : index
      %c0_21 = arith.constant 0 : index
      %27 = vector.load %arg3[%c0_19, %c0_20, %c0_21] : memref<2x8x32xf32, #tpu.memory_space<vmem>>, vector<2x8x32xf32>
      %28 = vector.shape_cast %27 : vector<2x8x32xf32> to vector<16x32xf32>
      %c0_22 = arith.constant 0 : index
      %c0_23 = arith.constant 0 : index
      %c0_24 = arith.constant 0 : index
      %29 = vector.load %arg4[%c0_22, %c0_23, %c0_24] : memref<2x8x32xf32, #tpu.memory_space<vmem>>, vector<2x8x32xf32>
      %30 = vector.shape_cast %29 : vector<2x8x32xf32> to vector<16x32xf32>
      %31 = arith.truncf %26 : vector<16x32xf32> to vector<16x32xbf16>
      %c0_25 = arith.constant 0 : index
      %c0_26 = arith.constant 0 : index
      %32 = vector.load %arg6[%c0_25, %c0_26] : memref<32x32xbf16, #tpu.memory_space<vmem>>, vector<32x32xbf16>
      %cst_27 = arith.constant dense<0.000000e+00> : vector<16x32xf32>
      %33 = tpu.matmul %31, %32, %cst_27 {dimension_numbers = #tpu.dot_dimension_numbers<[1], [0], [0], [1], [0, 0, 1, 1], [], []>} : vector<16x32xbf16>, vector<32x32xbf16>, vector<16x32xf32> -> vector<16x32xf32>
      %c0_28 = arith.constant 0 : index
      %c0_29 = arith.constant 0 : index
      %34 = vector.load %arg7[%c0_28, %c0_29] : memref<1x32xf32, #tpu.memory_space<vmem>>, vector<1x32xf32>
      %35 = vector.shape_cast %34 : vector<1x32xf32> to vector<32xf32>
      %36 = vector.shape_cast %35 : vector<32xf32> to vector<1x32xf32>
      %37 = vector.broadcast %36 : vector<1x32xf32> to vector<16x32xf32>
      %38 = arith.addf %33, %37 : vector<16x32xf32>
      %cst_30 = arith.constant 0.176776692 : f32
      %39 = vector.broadcast %cst_30 : f32 to vector<16x32xf32>
      %40 = arith.mulf %38, %39 : vector<16x32xf32>
      %41 = arith.truncf %40 : vector<16x32xf32> to vector<16x32xbf16>
      %42 = vector.shape_cast %41 : vector<16x32xbf16> to vector<2x8x32xbf16>
      %43 = arith.truncf %28 : vector<16x32xf32> to vector<16x32xbf16>
      %c0_31 = arith.constant 0 : index
      %c0_32 = arith.constant 0 : index
      %44 = vector.load %arg8[%c0_31, %c0_32] : memref<32x32xbf16, #tpu.memory_space<vmem>>, vector<32x32xbf16>
      %cst_33 = arith.constant dense<0.000000e+00> : vector<16x32xf32>
      %45 = tpu.matmul %43, %44, %cst_33 {dimension_numbers = #tpu.dot_dimension_numbers<[1], [0], [0], [1], [0, 0, 1, 1], [], []>} : vector<16x32xbf16>, vector<32x32xbf16>, vector<16x32xf32> -> vector<16x32xf32>
      %c0_34 = arith.constant 0 : index
      %c0_35 = arith.constant 0 : index
      %46 = vector.load %arg9[%c0_34, %c0_35] : memref<1x32xf32, #tpu.memory_space<vmem>>, vector<1x32xf32>
      %47 = vector.shape_cast %46 : vector<1x32xf32> to vector<32xf32>
      %48 = vector.shape_cast %47 : vector<32xf32> to vector<1x32xf32>
      %49 = vector.broadcast %48 : vector<1x32xf32> to vector<16x32xf32>
      %50 = arith.addf %45, %49 : vector<16x32xf32>
      %51 = arith.truncf %50 : vector<16x32xf32> to vector<16x32xbf16>
      %52 = vector.shape_cast %51 : vector<16x32xbf16> to vector<2x8x32xbf16>
      %53 = arith.truncf %30 : vector<16x32xf32> to vector<16x32xbf16>
      %c0_36 = arith.constant 0 : index
      %c0_37 = arith.constant 0 : index
      %54 = vector.load %arg10[%c0_36, %c0_37] : memref<32x32xbf16, #tpu.memory_space<vmem>>, vector<32x32xbf16>
      %cst_38 = arith.constant dense<0.000000e+00> : vector<16x32xf32>
      %55 = tpu.matmul %53, %54, %cst_38 {dimension_numbers = #tpu.dot_dimension_numbers<[1], [0], [0], [1], [0, 0, 1, 1], [], []>} : vector<16x32xbf16>, vector<32x32xbf16>, vector<16x32xf32> -> vector<16x32xf32>
      %c0_39 = arith.constant 0 : index
      %c0_40 = arith.constant 0 : index
      %56 = vector.load %arg11[%c0_39, %c0_40] : memref<1x32xf32, #tpu.memory_space<vmem>>, vector<1x32xf32>
      %57 = vector.shape_cast %56 : vector<1x32xf32> to vector<32xf32>
      %58 = vector.shape_cast %57 : vector<32xf32> to vector<1x32xf32>
      %59 = vector.broadcast %58 : vector<1x32xf32> to vector<16x32xf32>
      %60 = arith.addf %55, %59 : vector<16x32xf32>
      %61 = arith.truncf %60 : vector<16x32xf32> to vector<16x32xbf16>
      %62 = vector.shape_cast %61 : vector<16x32xbf16> to vector<2x8x32xbf16>
      %c0_41 = arith.constant 0 : index
      %c0_42 = arith.constant 0 : index
      %63 = vector.load %arg5[%c0_41, %c0_42] : memref<8x8xf32, #tpu.memory_space<vmem>>, vector<8x8xf32>
      %cst_43 = arith.constant 0xCD28965F : f32
      %64 = vector.broadcast %cst_43 : f32 to vector<8x8xf32>
      %65 = arith.mulf %63, %64 : vector<8x8xf32>
      %66 = vector.shape_cast %65 : vector<8x8xf32> to vector<1x8x8xf32>
      %67 = vector.extract_strided_slice %42 {offsets = [0, 0, 0], sizes = [2, 8, 8], strides = [1, 1, 1]} : vector<2x8x32xbf16> to vector<2x8x8xbf16>
      %68 = vector.extract_strided_slice %52 {offsets = [0, 0, 0], sizes = [2, 8, 8], strides = [1, 1, 1]} : vector<2x8x32xbf16> to vector<2x8x8xbf16>
      %69 = vector.extract_strided_slice %62 {offsets = [0, 0, 0], sizes = [2, 8, 8], strides = [1, 1, 1]} : vector<2x8x32xbf16> to vector<2x8x8xbf16>
      "tpu.trace_start"() <{level = 10 : i32, message = "bqd,bkd->bqk"}> : () -> ()
      %cst_44 = arith.constant dense<0.000000e+00> : vector<2x8x8xf32>
      %70 = tpu.matmul %67, %68, %cst_44 {dimension_numbers = #tpu.dot_dimension_numbers<[2], [2], [1], [1], [0, 0, 0, 1, 1, 1], [0], [0]>} : vector<2x8x8xbf16>, vector<2x8x8xbf16>, vector<2x8x8xf32> -> vector<2x8x8xf32>
      "tpu.trace_stop"() : () -> ()
      %71 = vector.broadcast %66 : vector<1x8x8xf32> to vector<2x8x8xf32>
      %72 = arith.addf %70, %71 : vector<2x8x8xf32>
      %cst_45 = arith.constant dense<0xFF800000> : vector<2x8xf32>
      %73 = vector.multi_reduction <maximumf>, %72, %cst_45 [2] : vector<2x8x8xf32> to vector<2x8xf32>
      %74 = vector.shape_cast %73 : vector<2x8xf32> to vector<2x8x1xf32>
      %75 = vector.broadcast %74 : vector<2x8x1xf32> to vector<2x8x8xf32>
      %76 = arith.subf %72, %75 : vector<2x8x8xf32>
      %77 = math.exp %76 : vector<2x8x8xf32>
      %cst_46 = arith.constant dense<0.000000e+00> : vector<2x8xf32>
      %78 = vector.multi_reduction <add>, %77, %cst_46 [2] : vector<2x8x8xf32> to vector<2x8xf32>
      %79 = vector.shape_cast %78 : vector<2x8xf32> to vector<2x8x1xf32>
      %80 = tpu.reciprocal %79 {approx = true} : vector<2x8x1xf32> -> vector<2x8x1xf32>
      %81 = vector.broadcast %80 : vector<2x8x1xf32> to vector<2x8x8xf32>
      %82 = arith.mulf %77, %81 : vector<2x8x8xf32>
      %83 = arith.truncf %82 : vector<2x8x8xf32> to vector<2x8x8xbf16>
      "tpu.trace_start"() <{level = 10 : i32, message = "bqk,bkd->bqd"}> : () -> ()
      %cst_47 = arith.constant dense<0.000000e+00> : vector<2x8x8xf32>
      %84 = tpu.matmul %83, %69, %cst_47 {dimension_numbers = #tpu.dot_dimension_numbers<[2], [1], [1], [2], [0, 0, 0, 1, 1, 2], [0], [0]>} : vector<2x8x8xbf16>, vector<2x8x8xbf16>, vector<2x8x8xf32> -> vector<2x8x8xf32>
      "tpu.trace_stop"() : () -> ()
      %85 = arith.truncf %84 : vector<2x8x8xf32> to vector<2x8x8xbf16>
      %c0_48 = arith.constant 0 : index
      %c0_49 = arith.constant 0 : index
      %c0_50 = arith.constant 0 : index
      %86 = vector.load %arg26[%c0_48, %c0_49, %c0_50] : memref<2x8x32xbf16, #tpu.memory_space<vmem>>, vector<2x8x8xbf16>
      tpu.vector_store %arg26[%c0_48, %c0_49, %c0_50], %85 {strides = array<i32>} : memref<2x8x32xbf16, #tpu.memory_space<vmem>>, vector<2x8x8xbf16>,
      %87 = vector.extract_strided_slice %42 {offsets = [0, 0, 8], sizes = [2, 8, 8], strides = [1, 1, 1]} : vector<2x8x32xbf16> to vector<2x8x8xbf16>
      %88 = vector.extract_strided_slice %52 {offsets = [0, 0, 8], sizes = [2, 8, 8], strides = [1, 1, 1]} : vector<2x8x32xbf16> to vector<2x8x8xbf16>
      %89 = vector.extract_strided_slice %62 {offsets = [0, 0, 8], sizes = [2, 8, 8], strides = [1, 1, 1]} : vector<2x8x32xbf16> to vector<2x8x8xbf16>
      "tpu.trace_start"() <{level = 10 : i32, message = "bqd,bkd->bqk"}> : () -> ()
      %cst_51 = arith.constant dense<0.000000e+00> : vector<2x8x8xf32>
      %90 = tpu.matmul %87, %88, %cst_51 {dimension_numbers = #tpu.dot_dimension_numbers<[2], [2], [1], [1], [0, 0, 0, 1, 1, 1], [0], [0]>} : vector<2x8x8xbf16>, vector<2x8x8xbf16>, vector<2x8x8xf32> -> vector<2x8x8xf32>
      "tpu.trace_stop"() : () -> ()
      %91 = vector.broadcast %66 : vector<1x8x8xf32> to vector<2x8x8xf32>
      %92 = arith.addf %90, %91 : vector<2x8x8xf32>
      %cst_52 = arith.constant dense<0xFF800000> : vector<2x8xf32>
      %93 = vector.multi_reduction <maximumf>, %92, %cst_52 [2] : vector<2x8x8xf32> to vector<2x8xf32>
      %94 = vector.shape_cast %93 : vector<2x8xf32> to vector<2x8x1xf32>
      %95 = vector.broadcast %94 : vector<2x8x1xf32> to vector<2x8x8xf32>
      %96 = arith.subf %92, %95 : vector<2x8x8xf32>
      %97 = math.exp %96 : vector<2x8x8xf32>
      %cst_53 = arith.constant dense<0.000000e+00> : vector<2x8xf32>
      %98 = vector.multi_reduction <add>, %97, %cst_53 [2] : vector<2x8x8xf32> to vector<2x8xf32>
      %99 = vector.shape_cast %98 : vector<2x8xf32> to vector<2x8x1xf32>
      %100 = tpu.reciprocal %99 {approx = true} : vector<2x8x1xf32> -> vector<2x8x1xf32>
      %101 = vector.broadcast %100 : vector<2x8x1xf32> to vector<2x8x8xf32>
      %102 = arith.mulf %97, %101 : vector<2x8x8xf32>
      %103 = arith.truncf %102 : vector<2x8x8xf32> to vector<2x8x8xbf16>
      "tpu.trace_start"() <{level = 10 : i32, message = "bqk,bkd->bqd"}> : () -> ()
      %cst_54 = arith.constant dense<0.000000e+00> : vector<2x8x8xf32>
      %104 = tpu.matmul %103, %89, %cst_54 {dimension_numbers = #tpu.dot_dimension_numbers<[2], [1], [1], [2], [0, 0, 0, 1, 1, 2], [0], [0]>} : vector<2x8x8xbf16>, vector<2x8x8xbf16>, vector<2x8x8xf32> -> vector<2x8x8xf32>
      "tpu.trace_stop"() : () -> ()
      %105 = arith.truncf %104 : vector<2x8x8xf32> to vector<2x8x8xbf16>
      %c0_55 = arith.constant 0 : index
      %c0_56 = arith.constant 0 : index
      %c8 = arith.constant 8 : index
      %106 = vector.load %arg26[%c0_55, %c0_56, %c8] : memref<2x8x32xbf16, #tpu.memory_space<vmem>>, vector<2x8x8xbf16>
      tpu.vector_store %arg26[%c0_55, %c0_56, %c8], %105 {strides = array<i32>} : memref<2x8x32xbf16, #tpu.memory_space<vmem>>, vector<2x8x8xbf16>,
      %107 = vector.extract_strided_slice %42 {offsets = [0, 0, 16], sizes = [2, 8, 8], strides = [1, 1, 1]} : vector<2x8x32xbf16> to vector<2x8x8xbf16>
      %108 = vector.extract_strided_slice %52 {offsets = [0, 0, 16], sizes = [2, 8, 8], strides = [1, 1, 1]} : vector<2x8x32xbf16> to vector<2x8x8xbf16>
      %109 = vector.extract_strided_slice %62 {offsets = [0, 0, 16], sizes = [2, 8, 8], strides = [1, 1, 1]} : vector<2x8x32xbf16> to vector<2x8x8xbf16>
      "tpu.trace_start"() <{level = 10 : i32, message = "bqd,bkd->bqk"}> : () -> ()
      %cst_57 = arith.constant dense<0.000000e+00> : vector<2x8x8xf32>
      %110 = tpu.matmul %107, %108, %cst_57 {dimension_numbers = #tpu.dot_dimension_numbers<[2], [2], [1], [1], [0, 0, 0, 1, 1, 1], [0], [0]>} : vector<2x8x8xbf16>, vector<2x8x8xbf16>, vector<2x8x8xf32> -> vector<2x8x8xf32>
      "tpu.trace_stop"() : () -> ()
      %111 = vector.broadcast %66 : vector<1x8x8xf32> to vector<2x8x8xf32>
      %112 = arith.addf %110, %111 : vector<2x8x8xf32>
      %cst_58 = arith.constant dense<0xFF800000> : vector<2x8xf32>
      %113 = vector.multi_reduction <maximumf>, %112, %cst_58 [2] : vector<2x8x8xf32> to vector<2x8xf32>
      %114 = vector.shape_cast %113 : vector<2x8xf32> to vector<2x8x1xf32>
      %115 = vector.broadcast %114 : vector<2x8x1xf32> to vector<2x8x8xf32>
      %116 = arith.subf %112, %115 : vector<2x8x8xf32>
      %117 = math.exp %116 : vector<2x8x8xf32>
      %cst_59 = arith.constant dense<0.000000e+00> : vector<2x8xf32>
      %118 = vector.multi_reduction <add>, %117, %cst_59 [2] : vector<2x8x8xf32> to vector<2x8xf32>
      %119 = vector.shape_cast %118 : vector<2x8xf32> to vector<2x8x1xf32>
      %120 = tpu.reciprocal %119 {approx = true} : vector<2x8x1xf32> -> vector<2x8x1xf32>
      %121 = vector.broadcast %120 : vector<2x8x1xf32> to vector<2x8x8xf32>
      %122 = arith.mulf %117, %121 : vector<2x8x8xf32>
      %123 = arith.truncf %122 : vector<2x8x8xf32> to vector<2x8x8xbf16>
      "tpu.trace_start"() <{level = 10 : i32, message = "bqk,bkd->bqd"}> : () -> ()
      %cst_60 = arith.constant dense<0.000000e+00> : vector<2x8x8xf32>
      %124 = tpu.matmul %123, %109, %cst_60 {dimension_numbers = #tpu.dot_dimension_numbers<[2], [1], [1], [2], [0, 0, 0, 1, 1, 2], [0], [0]>} : vector<2x8x8xbf16>, vector<2x8x8xbf16>, vector<2x8x8xf32> -> vector<2x8x8xf32>
      "tpu.trace_stop"() : () -> ()
      %125 = arith.truncf %124 : vector<2x8x8xf32> to vector<2x8x8xbf16>
      %c0_61 = arith.constant 0 : index
      %c0_62 = arith.constant 0 : index
      %c16 = arith.constant 16 : index
      %126 = vector.load %arg26[%c0_61, %c0_62, %c16] : memref<2x8x32xbf16, #tpu.memory_space<vmem>>, vector<2x8x8xbf16>
      tpu.vector_store %arg26[%c0_61, %c0_62, %c16], %125 {strides = array<i32>} : memref<2x8x32xbf16, #tpu.memory_space<vmem>>, vector<2x8x8xbf16>,
      %127 = vector.extract_strided_slice %42 {offsets = [0, 0, 24], sizes = [2, 8, 8], strides = [1, 1, 1]} : vector<2x8x32xbf16> to vector<2x8x8xbf16>
      %128 = vector.extract_strided_slice %52 {offsets = [0, 0, 24], sizes = [2, 8, 8], strides = [1, 1, 1]} : vector<2x8x32xbf16> to vector<2x8x8xbf16>
      %129 = vector.extract_strided_slice %62 {offsets = [0, 0, 24], sizes = [2, 8, 8], strides = [1, 1, 1]} : vector<2x8x32xbf16> to vector<2x8x8xbf16>
      "tpu.trace_start"() <{level = 10 : i32, message = "bqd,bkd->bqk"}> : () -> ()
      %cst_63 = arith.constant dense<0.000000e+00> : vector<2x8x8xf32>
      %130 = tpu.matmul %127, %128, %cst_63 {dimension_numbers = #tpu.dot_dimension_numbers<[2], [2], [1], [1], [0, 0, 0, 1, 1, 1], [0], [0]>} : vector<2x8x8xbf16>, vector<2x8x8xbf16>, vector<2x8x8xf32> -> vector<2x8x8xf32>
      "tpu.trace_stop"() : () -> ()
      %131 = vector.broadcast %66 : vector<1x8x8xf32> to vector<2x8x8xf32>
      %132 = arith.addf %130, %131 : vector<2x8x8xf32>
      %cst_64 = arith.constant dense<0xFF800000> : vector<2x8xf32>
      %133 = vector.multi_reduction <maximumf>, %132, %cst_64 [2] : vector<2x8x8xf32> to vector<2x8xf32>
      %134 = vector.shape_cast %133 : vector<2x8xf32> to vector<2x8x1xf32>
      %135 = vector.broadcast %134 : vector<2x8x1xf32> to vector<2x8x8xf32>
      %136 = arith.subf %132, %135 : vector<2x8x8xf32>
      %137 = math.exp %136 : vector<2x8x8xf32>
      %cst_65 = arith.constant dense<0.000000e+00> : vector<2x8xf32>
      %138 = vector.multi_reduction <add>, %137, %cst_65 [2] : vector<2x8x8xf32> to vector<2x8xf32>
      %139 = vector.shape_cast %138 : vector<2x8xf32> to vector<2x8x1xf32>
      %140 = tpu.reciprocal %139 {approx = true} : vector<2x8x1xf32> -> vector<2x8x1xf32>
      %141 = vector.broadcast %140 : vector<2x8x1xf32> to vector<2x8x8xf32>
      %142 = arith.mulf %137, %141 : vector<2x8x8xf32>
      %143 = arith.truncf %142 : vector<2x8x8xf32> to vector<2x8x8xbf16>
      "tpu.trace_start"() <{level = 10 : i32, message = "bqk,bkd->bqd"}> : () -> ()
      %cst_66 = arith.constant dense<0.000000e+00> : vector<2x8x8xf32>
      %144 = tpu.matmul %143, %129, %cst_66 {dimension_numbers = #tpu.dot_dimension_numbers<[2], [1], [1], [2], [0, 0, 0, 1, 1, 2], [0], [0]>} : vector<2x8x8xbf16>, vector<2x8x8xbf16>, vector<2x8x8xf32> -> vector<2x8x8xf32>
      "tpu.trace_stop"() : () -> ()
      %145 = arith.truncf %144 : vector<2x8x8xf32> to vector<2x8x8xbf16>
      %c0_67 = arith.constant 0 : index
      %c0_68 = arith.constant 0 : index
      %c24 = arith.constant 24 : index
      %146 = vector.load %arg26[%c0_67, %c0_68, %c24] : memref<2x8x32xbf16, #tpu.memory_space<vmem>>, vector<2x8x8xbf16>
      tpu.vector_store %arg26[%c0_67, %c0_68, %c24], %145 {strides = array<i32>} : memref<2x8x32xbf16, #tpu.memory_space<vmem>>, vector<2x8x8xbf16>,
      %c0_69 = arith.constant 0 : index
      %c0_70 = arith.constant 0 : index
      %c0_71 = arith.constant 0 : index
      %147 = vector.load %arg26[%c0_69, %c0_70, %c0_71] : memref<2x8x32xbf16, #tpu.memory_space<vmem>>, vector<2x8x32xbf16>
      %148 = vector.shape_cast %147 : vector<2x8x32xbf16> to vector<16x32xbf16>
      %c0_72 = arith.constant 0 : index
      %c0_73 = arith.constant 0 : index
      %149 = vector.load %arg12[%c0_72, %c0_73] : memref<32x32xbf16, #tpu.memory_space<vmem>>, vector<32x32xbf16>
      %cst_74 = arith.constant dense<0.000000e+00> : vector<16x32xf32>
      %150 = tpu.matmul %148, %149, %cst_74 {dimension_numbers = #tpu.dot_dimension_numbers<[1], [0], [0], [1], [0, 0, 1, 1], [], []>} : vector<16x32xbf16>, vector<32x32xbf16>, vector<16x32xf32> -> vector<16x32xf32>
      %c0_75 = arith.constant 0 : index
      %c0_76 = arith.constant 0 : index
      %151 = vector.load %arg13[%c0_75, %c0_76] : memref<1x32xf32, #tpu.memory_space<vmem>>, vector<1x32xf32>
      %152 = vector.shape_cast %151 : vector<1x32xf32> to vector<32xf32>
      %c0_77 = arith.constant 0 : index
      %c0_78 = arith.constant 0 : index
      %153 = vector.load %arg14[%c0_77, %c0_78] : memref<1x32xf32, #tpu.memory_space<vmem>>, vector<1x32xf32>
      %154 = vector.shape_cast %153 : vector<1x32xf32> to vector<32xf32>
      %c0_79 = arith.constant 0 : index
      %c0_80 = arith.constant 0 : index
      %155 = vector.load %arg15[%c0_79, %c0_80] : memref<1x32xf32, #tpu.memory_space<vmem>>, vector<1x32xf32>
      %156 = vector.shape_cast %155 : vector<1x32xf32> to vector<32xf32>
      %157 = vector.shape_cast %152 : vector<32xf32> to vector<1x32xf32>
      %158 = vector.broadcast %157 : vector<1x32xf32> to vector<16x32xf32>
      %159 = arith.addf %150, %158 : vector<16x32xf32>
      %160 = arith.addf %159, %26 : vector<16x32xf32>
      %cst_81 = arith.constant dense<0.000000e+00> : vector<16xf32>
      %161 = vector.multi_reduction <add>, %160, %cst_81 [1] : vector<16x32xf32> to vector<16xf32>
      %162 = vector.shape_cast %161 : vector<16xf32> to vector<16x1xf32>
      %cst_82 = arith.constant 3.200000e+01 : f32
      %163 = vector.broadcast %cst_82 : f32 to vector<16x1xf32>
      %164 = arith.divf %162, %163 : vector<16x1xf32>
      %165 = vector.broadcast %164 : vector<16x1xf32> to vector<16x32xf32>
      %166 = arith.subf %160, %165 : vector<16x32xf32>
      %167 = arith.mulf %166, %166 : vector<16x32xf32>
      %cst_83 = arith.constant dense<0.000000e+00> : vector<16xf32>
      %168 = vector.multi_reduction <add>, %167, %cst_83 [1] : vector<16x32xf32> to vector<16xf32>
      %169 = vector.shape_cast %168 : vector<16xf32> to vector<16x1xf32>
      %cst_84 = arith.constant 3.200000e+01 : f32
      %170 = vector.broadcast %cst_84 : f32 to vector<16x1xf32>
      %171 = arith.divf %169, %170 : vector<16x1xf32>
      %172 = vector.broadcast %164 : vector<16x1xf32> to vector<16x32xf32>
      %173 = arith.subf %160, %172 : vector<16x32xf32>
      %cst_85 = arith.constant 9.99999974E-6 : f32
      %174 = vector.broadcast %cst_85 : f32 to vector<16x1xf32>
      %175 = arith.addf %171, %174 : vector<16x1xf32>
      %176 = math.rsqrt %175 : vector<16x1xf32>
      %177 = vector.broadcast %176 : vector<16x1xf32> to vector<16x32xf32>
      %178 = arith.mulf %173, %177 : vector<16x32xf32>
      %179 = vector.shape_cast %154 : vector<32xf32> to vector<1x32xf32>
      %180 = vector.broadcast %179 : vector<1x32xf32> to vector<16x32xf32>
      %181 = arith.mulf %178, %180 : vector<16x32xf32>
      %182 = vector.shape_cast %156 : vector<32xf32> to vector<1x32xf32>
      %183 = vector.broadcast %182 : vector<1x32xf32> to vector<16x32xf32>
      %184 = arith.addf %181, %183 : vector<16x32xf32>
      %c0_86 = arith.constant 0 : index
      %c0_87 = arith.constant 0 : index
      %185 = vector.load %arg23[%c0_86, %c0_87] : memref<16x32xf32, #tpu.memory_space<vmem>>, vector<16x32xf32>
      tpu.vector_store %arg23[%c0_86, %c0_87], %184 {strides = array<i32>} : memref<16x32xf32, #tpu.memory_space<vmem>>, vector<16x32xf32>,
      %186 = arith.truncf %184 : vector<16x32xf32> to vector<16x32xbf16>
      %c0_88 = arith.constant 0 : index
      %c0_89 = arith.constant 0 : index
      %187 = vector.load %arg24[%c0_88, %c0_89] : memref<16x32xbf16, #tpu.memory_space<vmem>>, vector<16x32xbf16>
      tpu.vector_store %arg24[%c0_88, %c0_89], %186 {strides = array<i32>} : memref<16x32xbf16, #tpu.memory_space<vmem>>, vector<16x32xbf16>,
    } else {
    }
    %c0 = arith.constant 0 : index
    %c0_1 = arith.constant 0 : index
    %3 = vector.load %arg24[%c0, %c0_1] : memref<16x32xbf16, #tpu.memory_space<vmem>>, vector<16x32xbf16>
    %c0_2 = arith.constant 0 : index
    %c0_3 = arith.constant 0 : index
    %4 = vector.load %arg18[%c0_2, %c0_3] : memref<32x128xbf16, #tpu.memory_space<vmem>>, vector<32x128xbf16>
    %cst = arith.constant dense<0.000000e+00> : vector<16x128xf32>
    %5 = tpu.matmul %3, %4, %cst {dimension_numbers = #tpu.dot_dimension_numbers<[1], [0], [0], [1], [0, 0, 1, 1], [], []>} : vector<16x32xbf16>, vector<32x128xbf16>, vector<16x128xf32> -> vector<16x128xf32>
    %c0_4 = arith.constant 0 : index
    %c0_5 = arith.constant 0 : index
    %6 = vector.load %arg19[%c0_4, %c0_5] : memref<1x128xf32, #tpu.memory_space<vmem>>, vector<1x128xf32>
    %7 = vector.shape_cast %6 : vector<1x128xf32> to vector<128xf32>
    %8 = vector.shape_cast %7 : vector<128xf32> to vector<1x128xf32>
    %9 = vector.broadcast %8 : vector<1x128xf32> to vector<16x128xf32>
    %10 = arith.addf %5, %9 : vector<16x128xf32>
    %cst_6 = arith.constant 0.000000e+00 : f32
    %11 = vector.broadcast %cst_6 : f32 to vector<16x128xf32>
    %12 = arith.maximumf %10, %11 : vector<16x128xf32>
    %13 = arith.truncf %12 : vector<16x128xf32> to vector<16x128xbf16>
    %c0_7 = arith.constant 0 : index
    %c0_8 = arith.constant 0 : index
    %14 = vector.load %arg20[%c0_7, %c0_8] : memref<128x32xbf16, #tpu.memory_space<vmem>>, vector<128x32xbf16>
    %cst_9 = arith.constant dense<0.000000e+00> : vector<16x32xf32>
    %15 = tpu.matmul %13, %14, %cst_9 {dimension_numbers = #tpu.dot_dimension_numbers<[1], [0], [0], [1], [0, 0, 1, 1], [], []>} : vector<16x128xbf16>, vector<128x32xbf16>, vector<16x32xf32> -> vector<16x32xf32>
    %c0_i32_10 = arith.constant 0 : i32
    %16 = arith.cmpi eq, %arg1, %c0_i32_10 : i32
    %17 = arith.extui %16 : i1 to i32
    %c0_i32_11 = arith.constant 0 : i32
    %18 = arith.cmpi ne, %17, %c0_i32_11 : i32
    scf.if %18 {
      %c0_16 = arith.constant 0 : index
      %c0_17 = arith.constant 0 : index
      %25 = vector.load %arg25[%c0_16, %c0_17] : memref<16x32xf32, #tpu.memory_space<vmem>>, vector<16x32xf32>
      tpu.vector_store %arg25[%c0_16, %c0_17], %15 {strides = array<i32>} : memref<16x32xf32, #tpu.memory_space<vmem>>, vector<16x32xf32>,
    } else {
    }
    %c0_i32_12 = arith.constant 0 : i32
    %19 = arith.cmpi sgt, %arg1, %c0_i32_12 : i32
    %20 = arith.extui %19 : i1 to i32
    %c0_i32_13 = arith.constant 0 : i32
    %21 = arith.cmpi ne, %20, %c0_i32_13 : i32
    scf.if %21 {
      %c0_16 = arith.constant 0 : index
      %c0_17 = arith.constant 0 : index
      %25 = vector.load %arg25[%c0_16, %c0_17] : memref<16x32xf32, #tpu.memory_space<vmem>>, vector<16x32xf32>
      %26 = arith.addf %25, %15 : vector<16x32xf32>
      %c0_18 = arith.constant 0 : index
      %c0_19 = arith.constant 0 : index
      %27 = vector.load %arg25[%c0_18, %c0_19] : memref<16x32xf32, #tpu.memory_space<vmem>>, vector<16x32xf32>
      tpu.vector_store %arg25[%c0_18, %c0_19], %26 {strides = array<i32>} : memref<16x32xf32, #tpu.memory_space<vmem>>, vector<16x32xf32>,
    } else {
    }
    %c0_i32_14 = arith.constant 0 : i32
    %22 = arith.cmpi eq, %arg1, %c0_i32_14 : i32
    %23 = arith.extui %22 : i1 to i32
    %c0_i32_15 = arith.constant 0 : i32
    %24 = arith.cmpi ne, %23, %c0_i32_15 : i32
    scf.if %24 {
      %c0_16 = arith.constant 0 : index
      %c0_17 = arith.constant 0 : index
      %25 = vector.load %arg16[%c0_16, %c0_17] : memref<1x32xf32, #tpu.memory_space<vmem>>, vector<1x32xf32>
      %26 = vector.shape_cast %25 : vector<1x32xf32> to vector<32xf32>
      %c0_18 = arith.constant 0 : index
      %c0_19 = arith.constant 0 : index
      %27 = vector.load %arg17[%c0_18, %c0_19] : memref<1x32xf32, #tpu.memory_space<vmem>>, vector<1x32xf32>
      %28 = vector.shape_cast %27 : vector<1x32xf32> to vector<32xf32>
      %c0_20 = arith.constant 0 : index
      %c0_21 = arith.constant 0 : index
      %29 = vector.load %arg25[%c0_20, %c0_21] : memref<16x32xf32, #tpu.memory_space<vmem>>, vector<16x32xf32>
      %c0_22 = arith.constant 0 : index
      %c0_23 = arith.constant 0 : index
      %30 = vector.load %arg21[%c0_22, %c0_23] : memref<1x32xf32, #tpu.memory_space<vmem>>, vector<1x32xf32>
      %31 = vector.shape_cast %30 : vector<1x32xf32> to vector<32xf32>
      %32 = vector.shape_cast %31 : vector<32xf32> to vector<1x32xf32>
      %33 = vector.broadcast %32 : vector<1x32xf32> to vector<16x32xf32>
      %34 = arith.addf %29, %33 : vector<16x32xf32>
      %c0_24 = arith.constant 0 : index
      %c0_25 = arith.constant 0 : index
      %35 = vector.load %arg23[%c0_24, %c0_25] : memref<16x32xf32, #tpu.memory_space<vmem>>, vector<16x32xf32>
      %36 = arith.addf %34, %35 : vector<16x32xf32>
      %cst_26 = arith.constant dense<0.000000e+00> : vector<16xf32>
      %37 = vector.multi_reduction <add>, %36, %cst_26 [1] : vector<16x32xf32> to vector<16xf32>
      %38 = vector.shape_cast %37 : vector<16xf32> to vector<16x1xf32>
      %cst_27 = arith.constant 3.200000e+01 : f32
      %39 = vector.broadcast %cst_27 : f32 to vector<16x1xf32>
      %40 = arith.divf %38, %39 : vector<16x1xf32>
      %41 = vector.broadcast %40 : vector<16x1xf32> to vector<16x32xf32>
      %42 = arith.subf %36, %41 : vector<16x32xf32>
      %43 = arith.mulf %42, %42 : vector<16x32xf32>
      %cst_28 = arith.constant dense<0.000000e+00> : vector<16xf32>
      %44 = vector.multi_reduction <add>, %43, %cst_28 [1] : vector<16x32xf32> to vector<16xf32>
      %45 = vector.shape_cast %44 : vector<16xf32> to vector<16x1xf32>
      %cst_29 = arith.constant 3.200000e+01 : f32
      %46 = vector.broadcast %cst_29 : f32 to vector<16x1xf32>
      %47 = arith.divf %45, %46 : vector<16x1xf32>
      %48 = vector.broadcast %40 : vector<16x1xf32> to vector<16x32xf32>
      %49 = arith.subf %36, %48 : vector<16x32xf32>
      %cst_30 = arith.constant 9.99999974E-6 : f32
      %50 = vector.broadcast %cst_30 : f32 to vector<16x1xf32>
      %51 = arith.addf %47, %50 : vector<16x1xf32>
      %52 = math.rsqrt %51 : vector<16x1xf32>
      %53 = vector.broadcast %52 : vector<16x1xf32> to vector<16x32xf32>
      %54 = arith.mulf %49, %53 : vector<16x32xf32>
      %55 = vector.shape_cast %26 : vector<32xf32> to vector<1x32xf32>
      %56 = vector.broadcast %55 : vector<1x32xf32> to vector<16x32xf32>
      %57 = arith.mulf %54, %56 : vector<16x32xf32>
      %58 = vector.shape_cast %28 : vector<32xf32> to vector<1x32xf32>
      %59 = vector.broadcast %58 : vector<1x32xf32> to vector<16x32xf32>
      %60 = arith.addf %57, %59 : vector<16x32xf32>
      %61 = vector.shape_cast %60 : vector<16x32xf32> to vector<2x8x32xf32>
      %c0_31 = arith.constant 0 : index
      %c0_32 = arith.constant 0 : index
      %c0_33 = arith.constant 0 : index
      %62 = vector.load %arg22[%c0_31, %c0_32, %c0_33] : memref<2x8x32xf32, #tpu.memory_space<vmem>>, vector<2x8x32xf32>
      tpu.vector_store %arg22[%c0_31, %c0_32, %c0_33], %61 {strides = array<i32>} : memref<2x8x32xf32, #tpu.memory_space<vmem>>, vector<2x8x32xf32>,
    } else {
    }
    return
  }
  func.func @transform_0(%arg0: i32, %arg1: i32) -> (i32, i32, i32) {
    %c0_i32 = arith.constant 0 : i32
    %c0_i32_0 = arith.constant 0 : i32
    %c0_i32_1 = arith.constant 0 : i32
    return %arg0, %c0_i32, %c0_i32_0 : i32, i32, i32
  }
  func.func @transform_1(%arg0: i32, %arg1: i32) -> (i32, i32, i32) {
    %c0_i32 = arith.constant 0 : i32
    %c0_i32_0 = arith.constant 0 : i32
    %c0_i32_1 = arith.constant 0 : i32
    return %arg0, %c0_i32, %c0_i32_0 : i32, i32, i32
  }
  func.func @transform_2(%arg0: i32, %arg1: i32) -> (i32, i32, i32) {
    %c0_i32 = arith.constant 0 : i32
    %c0_i32_0 = arith.constant 0 : i32
    %c0_i32_1 = arith.constant 0 : i32
    return %arg0, %c0_i32, %c0_i32_0 : i32, i32, i32
  }
  func.func @transform_3(%arg0: i32, %arg1: i32) -> (i32, i32) {
    %c0_i32 = arith.constant 0 : i32
    %c0_i32_0 = arith.constant 0 : i32
    %c0_i32_1 = arith.constant 0 : i32
    return %c0_i32, %c0_i32_0 : i32, i32
  }
  func.func @transform_4(%arg0: i32, %arg1: i32) -> (i32, i32) {
    %c0_i32 = arith.constant 0 : i32
    %c0_i32_0 = arith.constant 0 : i32
    %c0_i32_1 = arith.constant 0 : i32
    return %c0_i32, %c0_i32_0 : i32, i32
  }
  func.func @transform_5(%arg0: i32, %arg1: i32) -> (i32, i32) {
    %c0_i32 = arith.constant 0 : i32
    %c0_i32_0 = arith.constant 0 : i32
    %c0_i32_1 = arith.constant 0 : i32
    return %c0_i32, %c0_i32_0 : i32, i32
  }
  func.func @transform_6(%arg0: i32, %arg1: i32) -> (i32, i32) {
    %c0_i32 = arith.constant 0 : i32
    %c0_i32_0 = arith.constant 0 : i32
    %c0_i32_1 = arith.constant 0 : i32
    return %c0_i32, %c0_i32_0 : i32, i32
  }
  func.func @transform_7(%arg0: i32, %arg1: i32) -> (i32, i32) {
    %c0_i32 = arith.constant 0 : i32
    %c0_i32_0 = arith.constant 0 : i32
    %c0_i32_1 = arith.constant 0 : i32
    return %c0_i32, %c0_i32_0 : i32, i32
  }
  func.func @transform_8(%arg0: i32, %arg1: i32) -> (i32, i32) {
    %c0_i32 = arith.constant 0 : i32
    %c0_i32_0 = arith.constant 0 : i32
    %c0_i32_1 = arith.constant 0 : i32
    return %c0_i32, %c0_i32_0 : i32, i32
  }
  func.func @transform_9(%arg0: i32, %arg1: i32) -> (i32, i32) {
    %c0_i32 = arith.constant 0 : i32
    %c0_i32_0 = arith.constant 0 : i32
    %c0_i32_1 = arith.constant 0 : i32
    return %c0_i32, %c0_i32_0 : i32, i32
  }
  func.func @transform_10(%arg0: i32, %arg1: i32) -> (i32, i32) {
    %c0_i32 = arith.constant 0 : i32
    %c0_i32_0 = arith.constant 0 : i32
    %c0_i32_1 = arith.constant 0 : i32
    return %c0_i32, %c0_i32_0 : i32, i32
  }
  func.func @transform_11(%arg0: i32, %arg1: i32) -> (i32, i32) {
    %c0_i32 = arith.constant 0 : i32
    %c0_i32_0 = arith.constant 0 : i32
    %c0_i32_1 = arith.constant 0 : i32
    return %c0_i32, %c0_i32_0 : i32, i32
  }
  func.func @transform_12(%arg0: i32, %arg1: i32) -> (i32, i32) {
    %c0_i32 = arith.constant 0 : i32
    %c0_i32_0 = arith.constant 0 : i32
    %c0_i32_1 = arith.constant 0 : i32
    return %c0_i32, %c0_i32_0 : i32, i32
  }
  func.func @transform_13(%arg0: i32, %arg1: i32) -> (i32, i32) {
    %c0_i32 = arith.constant 0 : i32
    %c0_i32_0 = arith.constant 0 : i32
    %c0_i32_1 = arith.constant 0 : i32
    return %c0_i32, %c0_i32_0 : i32, i32
  }
  func.func @transform_14(%arg0: i32, %arg1: i32) -> (i32, i32) {
    %c0_i32 = arith.constant 0 : i32
    %c0_i32_0 = arith.constant 0 : i32
    %c0_i32_1 = arith.constant 0 : i32
    return %c0_i32, %c0_i32_0 : i32, i32
  }
  func.func @transform_15(%arg0: i32, %arg1: i32) -> (i32, i32) {
    %c0_i32 = arith.constant 0 : i32
    %c0_i32_0 = arith.constant 0 : i32
    %c0_i32_1 = arith.constant 0 : i32
    return %c0_i32, %c0_i32_0 : i32, i32
  }
  func.func @transform_16(%arg0: i32, %arg1: i32) -> (i32, i32) {
    %c0_i32 = arith.constant 0 : i32
    %c0_i32_0 = arith.constant 0 : i32
    return %c0_i32, %arg1 : i32, i32
  }
  func.func @transform_17(%arg0: i32, %arg1: i32) -> (i32, i32) {
    %c0_i32 = arith.constant 0 : i32
    %c0_i32_0 = arith.constant 0 : i32
    return %c0_i32, %arg1 : i32, i32
  }
  func.func @transform_18(%arg0: i32, %arg1: i32) -> (i32, i32) {
    %c0_i32 = arith.constant 0 : i32
    %c0_i32_0 = arith.constant 0 : i32
    return %arg1, %c0_i32 : i32, i32
  }
  func.func @transform_19(%arg0: i32, %arg1: i32) -> (i32, i32) {
    %c0_i32 = arith.constant 0 : i32
    %c0_i32_0 = arith.constant 0 : i32
    %c0_i32_1 = arith.constant 0 : i32
    return %c0_i32, %c0_i32_0 : i32, i32
  }
  func.func @transform_20(%arg0: i32, %arg1: i32) -> (i32, i32, i32) {
    %c0_i32 = arith.constant 0 : i32
    %c0_i32_0 = arith.constant 0 : i32
    %c0_i32_1 = arith.constant 0 : i32
    return %arg0, %c0_i32, %c0_i32_0 : i32, i32, i32
  }
}

</mosaic_0001>

<llo_original>
// kernel: tpu_custom_call.1
$region0: #{tpu_custom_call.1}
  #allocation0 [shape = 'u32[]', space=smem, size = 0x4, offset = 0x4, fixed_abs, tag = 'smem constant byte address 0x4 - core index']
  #allocation1 [shape = 'u32[72,128]{1,0:T(1,128)}', space=vmem, size = 0x9000, scoped, tag = 'internal scratch']
  #allocation2 [shape = 'f32[16,32]{1,0:T(8,128)}', space=vmem, size = 0x2000, scoped, tag = 'scratch operand']
  #allocation3 [shape = 'bf16[16,32]{1,0:T(8,128)(2,1)}', space=vmem, size = 0x1000, scoped, tag = 'scratch operand']
  #allocation4 [shape = 'f32[16,32]{1,0:T(8,128)}', space=vmem, size = 0x2000, scoped, tag = 'scratch operand']
  #allocation5 [shape = 'bf16[2,8,32]{2,1,0:T(8,128)(2,1)}', space=vmem, size = 0x1000, scoped, tag = 'scratch operand']
  %s0 = inlined_call_operand.vmem [shape: f32[2,8,32], index: 0, kind: input, shape index: {}]
  %s1 = inlined_call_operand.vmem [shape: f32[2,8,32], index: 1, kind: input, shape index: {}]
  %s2 = inlined_call_operand.vmem [shape: f32[2,8,32], index: 2, kind: input, shape index: {}]
  %s3 = inlined_call_operand.hbm [shape: f32[8,8], index: 3, kind: input, shape index: {}]
  %s4 = inlined_call_operand.vmem [shape: bf16[32,32], index: 4, kind: input, shape index: {}]
  %s5 = inlined_call_operand.vmem [shape: f32[1,32], index: 5, kind: input, shape index: {}]
  %s6 = inlined_call_operand.vmem [shape: bf16[32,32], index: 6, kind: input, shape index: {}]
  %s7 = inlined_call_operand.hbm [shape: f32[1,32], index: 7, kind: input, shape index: {}]
  %s8 = inlined_call_operand.hbm [shape: bf16[32,32], index: 8, kind: input, shape index: {}]
  %s9 = inlined_call_operand.hbm [shape: f32[1,32], index: 9, kind: input, shape index: {}]
  %s10 = inlined_call_operand.hbm [shape: bf16[32,32], index: 10, kind: input, shape index: {}]
  %s11 = inlined_call_operand.hbm [shape: f32[1,32], index: 11, kind: input, shape index: {}]
  %s12 = inlined_call_operand.hbm [shape: f32[1,32], index: 12, kind: input, shape index: {}]
  %s13 = inlined_call_operand.hbm [shape: f32[1,32], index: 13, kind: input, shape index: {}]
  %s14 = inlined_call_operand.hbm [shape: f32[1,32], index: 14, kind: input, shape index: {}]
  %s15 = inlined_call_operand.hbm [shape: f32[1,32], index: 15, kind: input, shape index: {}]
  %s16 = inlined_call_operand.hbm [shape: bf16[32,128], index: 16, kind: input, shape index: {}]
  %s17 = inlined_call_operand.hbm [shape: f32[1,128], index: 17, kind: input, shape index: {}]
  %s18 = inlined_call_operand.vmem [shape: bf16[128,32], index: 18, kind: input, shape index: {}]
  %s19 = inlined_call_operand.hbm [shape: f32[1,32], index: 19, kind: input, shape index: {}]
  %s20 = inlined_call_operand.hbm [shape: f32[2,8,32], index: 20, kind: output, shape index: {}]
  %s21 = sld [smem:[#allocation0]]
  $region158: #{tpu_custom_call.1} parent=0
    _
  %s23 = ssub.s32 1, %s21
  %s24 = scalar_select 0, %s23, %s21
  $region1: #{tpu_custom_call.1} parent=0
    #allocation6 [shape = 'u8[4096]{0}', space=vmem, size = 0x1000, scoped, tag = 'input window, operand 3, single buffered']
    #allocation7 [shape = 's32[1]{0}', space=sflag, size = 0x4, scoped, tag = 'scoped memory for tpu_custom_call.1']
    #allocation8 [shape = 's32[1]{0}', space=sflag, size = 0x4, scoped, tag = 'scoped memory for tpu_custom_call.1']
    #allocation9 [shape = 'u8[512]{0}', space=vmem, size = 0x400, scoped, tag = 'input window, operand 7, single buffered']
    #allocation10 [shape = 's32[1]{0}', space=sflag, size = 0x4, scoped, tag = 'scoped memory for tpu_custom_call.1']
    #allocation11 [shape = 'u8[8192]{0}', space=vmem, size = 0x2000, scoped, tag = 'input window, operand 8, single buffered']
    #allocation12 [shape = 'u8[512]{0}', space=vmem, size = 0x400, scoped, tag = 'input window, operand 9, single buffered']
    #allocation13 [shape = 's32[1]{0}', space=sflag, size = 0x4, scoped, tag = 'scoped memory for tpu_custom_call.1']
    #allocation14 [shape = 'u8[8192]{0}', space=vmem, size = 0x2000, scoped, tag = 'input window, operand 10, single buffered']
    #allocation15 [shape = 'u8[512]{0}', space=vmem, size = 0x400, scoped, tag = 'input window, operand 11, single buffered']
    #allocation16 [shape = 's32[1]{0}', space=sflag, size = 0x4, scoped, tag = 'scoped memory for tpu_custom_call.1']
    #allocation17 [shape = 'u8[512]{0}', space=vmem, size = 0x400, scoped, tag = 'input window, operand 12, single buffered']
    #allocation18 [shape = 'u8[512]{0}', space=vmem, size = 0x400, scoped, tag = 'input window, operand 13, single buffered']
    #allocation19 [shape = 's32[1]{0}', space=sflag, size = 0x4, scoped, tag = 'scoped memory for tpu_custom_call.1']
    #allocation20 [shape = 'u8[512]{0}', space=vmem, size = 0x400, scoped, tag = 'input window, operand 14, single buffered']
    #allocation21 [shape = 'u8[512]{0}', space=vmem, size = 0x400, scoped, tag = 'input window, operand 15, single buffered']
    #allocation22 [shape = 's32[1]{0}', space=sflag, size = 0x4, scoped, tag = 'scoped memory for tpu_custom_call.1']
    #allocation23 [shape = 'u8[8192]{0}', space=vmem, size = 0x2000, scoped, tag = 'input window, operand 16, single buffered']
    #allocation24 [shape = 'u8[512]{0}', space=vmem, size = 0x400, scoped, tag = 'input window, operand 17, single buffered']
    #allocation25 [shape = 's32[1]{0}', space=sflag, size = 0x4, scoped, tag = 'scoped memory for tpu_custom_call.1']
    #allocation26 [shape = 'u8[512]{0}', space=vmem, size = 0x400, scoped, tag = 'input window, operand 19, single buffered']
    #allocation27 [shape = 'u8[8192]{0}', space=vmem, size = 0x2000, scoped, tag = 'output window, operand 0, single buffered']
    %25 = vsyncpa [#allocation7], 0
    %26 = vsyncpa [#allocation10], 0
    %27 = vsyncpa [#allocation13], 0
    %28 = vsyncpa [#allocation16], 0
    %29 = vsyncpa [#allocation19], 0
    %30 = vsyncpa [#allocation22], 0
    %31 = vsyncpa [#allocation25], 0
    %32 = vsyncpa [#allocation8], 0
    // Predicated region
    $region2: #{tpu_custom_call.1} parent=1 // pred_check
      _
    $region3: #{tpu_custom_call.1} parent=1 // pred_check_branch
      %34 = sbr.rel (0) target = $region5
    $region4: #{tpu_custom_call.1} parent=1 // pred_region
      _
    $region5: #{tpu_custom_call.1} parent=1 // pred_fallthru
      _
    // Predicated region
    $region6: #{tpu_custom_call.1} parent=1 // pred_check
      _
    $region7: #{tpu_custom_call.1} parent=1 // pred_check_branch
      %36 = sbr.rel (0) target = $region9
    $region8: #{tpu_custom_call.1} parent=1 // pred_region
      _
    $region9: #{tpu_custom_call.1} parent=1 // pred_fallthru
      _
    // Predicated region
    $region10: #{tpu_custom_call.1} parent=1 // pred_check
      _
    $region11: #{tpu_custom_call.1} parent=1 // pred_check_branch
      %38 = sbr.rel (0) target = $region13
    $region12: #{tpu_custom_call.1} parent=1 // pred_region
      _
    $region13: #{tpu_custom_call.1} parent=1 // pred_fallthru
      _
    // Predicated region
    $region14: #{tpu_custom_call.1} parent=1 // pred_check
      _
    $region15: #{tpu_custom_call.1} parent=1 // pred_check_branch
      %40 = sbr.rel (0) target = $region17
    $region16: #{tpu_custom_call.1} parent=1 // pred_region
      %42 = vsyncadd [#allocation7], 0
      %s44 = sshll.u32 %s3, 4
      %s45 = int_to_ptr.hbm [resolvable:$true] %s44
      %s46 = sshll.u32 [#allocation6], 4
      %s47 = int_to_ptr.vmem [resolvable:$true] %s46
      %49 = dma.hbm_to_vmem [thread:$0]  %s45, 128, %s47, [#allocation7]
    $region17: #{tpu_custom_call.1} parent=1 // pred_fallthru
      _
    // Predicated region
    $region18: #{tpu_custom_call.1} parent=1 // pred_check
      _
    $region19: #{tpu_custom_call.1} parent=1 // pred_check_branch
      %51 = sbr.rel (0) target = $region21
    $region20: #{tpu_custom_call.1} parent=1 // pred_region
      _
    $region21: #{tpu_custom_call.1} parent=1 // pred_fallthru
      _
    // Predicated region
    $region22: #{tpu_custom_call.1} parent=1 // pred_check
      _
    $region23: #{tpu_custom_call.1} parent=1 // pred_check_branch
      %53 = sbr.rel (0) target = $region25
    $region24: #{tpu_custom_call.1} parent=1 // pred_region
      _
    $region25: #{tpu_custom_call.1} parent=1 // pred_fallthru
      _
    // Predicated region
    $region26: #{tpu_custom_call.1} parent=1 // pred_check
      _
    $region27: #{tpu_custom_call.1} parent=1 // pred_check_branch
      %55 = sbr.rel (0) target = $region29
    $region28: #{tpu_custom_call.1} parent=1 // pred_region
      _
    $region29: #{tpu_custom_call.1} parent=1 // pred_fallthru
      _
    // Predicated region
    $region30: #{tpu_custom_call.1} parent=1 // pred_check
      _
    $region31: #{tpu_custom_call.1} parent=1 // pred_check_branch
      %57 = sbr.rel (0) target = $region33
    $region32: #{tpu_custom_call.1} parent=1 // pred_region
      %59 = vsyncadd [#allocation10], 0
      %s61 = sshll.u32 %s7, 4
      %s62 = int_to_ptr.hbm [resolvable:$true] %s61
      %s63 = sshll.u32 [#allocation9], 4
      %s64 = int_to_ptr.vmem [resolvable:$true] %s63
      %66 = dma.hbm_to_vmem [thread:$0]  %s62, 16, %s64, [#allocation10]
    $region33: #{tpu_custom_call.1} parent=1 // pred_fallthru
      _
    // Predicated region
    $region34: #{tpu_custom_call.1} parent=1 // pred_check
      _
    $region35: #{tpu_custom_call.1} parent=1 // pred_check_branch
      %68 = sbr.rel (0) target = $region37
    $region36: #{tpu_custom_call.1} parent=1 // pred_region
      %70 = vsyncadd [#allocation10], 0
      %s71 = sshll.u32 %s8, 4
      %s72 = int_to_ptr.hbm [resolvable:$true] %s71
      %s73 = sshll.u32 [#allocation11], 4
      %s74 = int_to_ptr.vmem [resolvable:$true] %s73
      %79 = dma.hbm_to_vmem [thread:$0]  %s72, 256, %s74, [#allocation10], 64, 64, 4
    $region37: #{tpu_custom_call.1} parent=1 // pred_fallthru
      _
    // Predicated region
    $region38: #{tpu_custom_call.1} parent=1 // pred_check
      _
    $region39: #{tpu_custom_call.1} parent=1 // pred_check_branch
      %81 = sbr.rel (0) target = $region41
    $region40: #{tpu_custom_call.1} parent=1 // pred_region
      %83 = vsyncadd [#allocation13], 0
      %s85 = sshll.u32 %s9, 4
      %s86 = int_to_ptr.hbm [resolvable:$true] %s85
      %s87 = sshll.u32 [#allocation12], 4
      %s88 = int_to_ptr.vmem [resolvable:$true] %s87
      %90 = dma.hbm_to_vmem [thread:$0]  %s86, 16, %s88, [#allocation13]
    $region41: #{tpu_custom_call.1} parent=1 // pred_fallthru
      _
    // Predicated region
    $region42: #{tpu_custom_call.1} parent=1 // pred_check
      _
    $region43: #{tpu_custom_call.1} parent=1 // pred_check_branch
      %92 = sbr.rel (0) target = $region45
    $region44: #{tpu_custom_call.1} parent=1 // pred_region
      %94 = vsyncadd [#allocation13], 0
      %s95 = sshll.u32 %s10, 4
      %s96 = int_to_ptr.hbm [resolvable:$true] %s95
      %s97 = sshll.u32 [#allocation14], 4
      %s98 = int_to_ptr.vmem [resolvable:$true] %s97
      %103 = dma.hbm_to_vmem [thread:$0]  %s96, 256, %s98, [#allocation13], 64, 64, 4
    $region45: #{tpu_custom_call.1} parent=1 // pred_fallthru
      _
    // Predicated region
    $region46: #{tpu_custom_call.1} parent=1 // pred_check
      _
    $region47: #{tpu_custom_call.1} parent=1 // pred_check_branch
      %105 = sbr.rel (0) target = $region49
    $region48: #{tpu_custom_call.1} parent=1 // pred_region
      %107 = vsyncadd [#allocation16], 0
      %s109 = sshll.u32 %s11, 4
      %s110 = int_to_ptr.hbm [resolvable:$true] %s109
      %s111 = sshll.u32 [#allocation15], 4
      %s112 = int_to_ptr.vmem [resolvable:$true] %s111
      %114 = dma.hbm_to_vmem [thread:$0]  %s110, 16, %s112, [#allocation16]
    $region49: #{tpu_custom_call.1} parent=1 // pred_fallthru
      _
    // Predicated region
    $region50: #{tpu_custom_call.1} parent=1 // pred_check
      _
    $region51: #{tpu_custom_call.1} parent=1 // pred_check_branch
      %116 = sbr.rel (0) target = $region53
    $region52: #{tpu_custom_call.1} parent=1 // pred_region
      %118 = vsyncadd [#allocation16], 0
      %s120 = sshll.u32 %s12, 4
      %s121 = int_to_ptr.hbm [resolvable:$true] %s120
      %s122 = sshll.u32 [#allocation17], 4
      %s123 = int_to_ptr.vmem [resolvable:$true] %s122
      %125 = dma.hbm_to_vmem [thread:$0]  %s121, 16, %s123, [#allocation16]
    $region53: #{tpu_custom_call.1} parent=1 // pred_fallthru
      _
    // Predicated region
    $region54: #{tpu_custom_call.1} parent=1 // pred_check
      _
    $region55: #{tpu_custom_call.1} parent=1 // pred_check_branch
      %127 = sbr.rel (0) target = $region57
    $region56: #{tpu_custom_call.1} parent=1 // pred_region
      %129 = vsyncadd [#allocation19], 0
      %s131 = sshll.u32 %s13, 4
      %s132 = int_to_ptr.hbm [resolvable:$true] %s131
      %s133 = sshll.u32 [#allocation18], 4
      %s134 = int_to_ptr.vmem [resolvable:$true] %s133
      %136 = dma.hbm_to_vmem [thread:$0]  %s132, 16, %s134, [#allocation19]
    $region57: #{tpu_custom_call.1} parent=1 // pred_fallthru
      _
    // Predicated region
    $region58: #{tpu_custom_call.1} parent=1 // pred_check
      _
    $region59: #{tpu_custom_call.1} parent=1 // pred_check_branch
      %138 = sbr.rel (0) target = $region61
    $region60: #{tpu_custom_call.1} parent=1 // pred_region
      %140 = vsyncadd [#allocation19], 0
      %s142 = sshll.u32 %s14, 4
      %s143 = int_to_ptr.hbm [resolvable:$true] %s142
      %s144 = sshll.u32 [#allocation20], 4
      %s145 = int_to_ptr.vmem [resolvable:$true] %s144
      %147 = dma.hbm_to_vmem [thread:$0]  %s143, 16, %s145, [#allocation19]
    $region61: #{tpu_custom_call.1} parent=1 // pred_fallthru
      _
    // Predicated region
    $region62: #{tpu_custom_call.1} parent=1 // pred_check
      _
    $region63: #{tpu_custom_call.1} parent=1 // pred_check_branch
      %149 = sbr.rel (0) target = $region65
    $region64: #{tpu_custom_call.1} parent=1 // pred_region
      %151 = vsyncadd [#allocation22], 0
      %s153 = sshll.u32 %s15, 4
      %s154 = int_to_ptr.hbm [resolvable:$true] %s153
      %s155 = sshll.u32 [#allocation21], 4
      %s156 = int_to_ptr.vmem [resolvable:$true] %s155
      %158 = dma.hbm_to_vmem [thread:$0]  %s154, 16, %s156, [#allocation22]
    $region65: #{tpu_custom_call.1} parent=1 // pred_fallthru
      _
    // Predicated region
    $region66: #{tpu_custom_call.1} parent=1 // pred_check
      _
    $region67: #{tpu_custom_call.1} parent=1 // pred_check_branch
      %160 = sbr.rel (0) target = $region69
    $region68: #{tpu_custom_call.1} parent=1 // pred_region
      %162 = vsyncadd [#allocation22], 0
      %s163 = sshll.u32 %s16, 4
      %s164 = int_to_ptr.hbm [resolvable:$true] %s163
      %s165 = sshll.u32 [#allocation23], 4
      %s166 = int_to_ptr.vmem [resolvable:$true] %s165
      %171 = dma.hbm_to_vmem [thread:$0]  %s164, 256, %s166, [#allocation22], 64, 64, 4
    $region69: #{tpu_custom_call.1} parent=1 // pred_fallthru
      _
    // Predicated region
    $region70: #{tpu_custom_call.1} parent=1 // pred_check
      _
    $region71: #{tpu_custom_call.1} parent=1 // pred_check_branch
      %173 = sbr.rel (0) target = $region73
    $region72: #{tpu_custom_call.1} parent=1 // pred_region
      %175 = vsyncadd [#allocation25], 0
      %s177 = sshll.u32 %s17, 4
      %s178 = int_to_ptr.hbm [resolvable:$true] %s177
      %s179 = sshll.u32 [#allocation24], 4
      %s180 = int_to_ptr.vmem [resolvable:$true] %s179
      %182 = dma.hbm_to_vmem [thread:$0]  %s178, 16, %s180, [#allocation25]
    $region73: #{tpu_custom_call.1} parent=1 // pred_fallthru
      _
    // Predicated region
    $region74: #{tpu_custom_call.1} parent=1 // pred_check
      _
    $region75: #{tpu_custom_call.1} parent=1 // pred_check_branch
      %184 = sbr.rel (0) target = $region77
    $region76: #{tpu_custom_call.1} parent=1 // pred_region
      _
    $region77: #{tpu_custom_call.1} parent=1 // pred_fallthru
      _
    // Predicated region
    $region78: #{tpu_custom_call.1} parent=1 // pred_check
      _
    $region79: #{tpu_custom_call.1} parent=1 // pred_check_branch
      %186 = sbr.rel (0) target = $region81
    $region80: #{tpu_custom_call.1} parent=1 // pred_region
      %188 = vsyncadd [#allocation25], 0
      %s190 = sshll.u32 %s19, 4
      %s191 = int_to_ptr.hbm [resolvable:$true] %s190
      %s192 = sshll.u32 [#allocation26], 4
      %s193 = int_to_ptr.vmem [resolvable:$true] %s192
      %195 = dma.hbm_to_vmem [thread:$0]  %s191, 16, %s193, [#allocation25]
    $region81: #{tpu_custom_call.1} parent=1 // pred_fallthru
      _
    // Predicated region
    $region82: #{tpu_custom_call.1} parent=1 // pred_check
      _
    $region83: #{tpu_custom_call.1} parent=1 // pred_check_branch
      %197 = sbr.rel (0) target = $region85
    $region84: #{tpu_custom_call.1} parent=1 // pred_region
      %199 = dma.done [#allocation7], 128
    $region85: #{tpu_custom_call.1} parent=1 // pred_fallthru
      _
    // Predicated region
    $region86: #{tpu_custom_call.1} parent=1 // pred_check
      _
    $region87: #{tpu_custom_call.1} parent=1 // pred_check_branch
      %201 = sbr.rel (0) target = $region89
    $region88: #{tpu_custom_call.1} parent=1 // pred_region
      %203 = dma.done [#allocation10], 16
    $region89: #{tpu_custom_call.1} parent=1 // pred_fallthru
      _
    // Predicated region
    $region90: #{tpu_custom_call.1} parent=1 // pred_check
      _
    $region91: #{tpu_custom_call.1} parent=1 // pred_check_branch
      %205 = sbr.rel (0) target = $region93
    $region92: #{tpu_custom_call.1} parent=1 // pred_region
      %207 = dma.done [#allocation10], 256
    $region93: #{tpu_custom_call.1} parent=1 // pred_fallthru
      _
    // Predicated region
    $region94: #{tpu_custom_call.1} parent=1 // pred_check
      _
    $region95: #{tpu_custom_call.1} parent=1 // pred_check_branch
      %209 = sbr.rel (0) target = $region97
    $region96: #{tpu_custom_call.1} parent=1 // pred_region
      %211 = dma.done [#allocation13], 16
    $region97: #{tpu_custom_call.1} parent=1 // pred_fallthru
      _
    // Predicated region
    $region98: #{tpu_custom_call.1} parent=1 // pred_check
      _
    $region99: #{tpu_custom_call.1} parent=1 // pred_check_branch
      %213 = sbr.rel (0) target = $region101
    $region100: #{tpu_custom_call.1} parent=1 // pred_region
      %215 = dma.done [#allocation13], 256
    $region101: #{tpu_custom_call.1} parent=1 // pred_fallthru
      _
    // Predicated region
    $region102: #{tpu_custom_call.1} parent=1 // pred_check
      _
    $region103: #{tpu_custom_call.1} parent=1 // pred_check_branch
      %217 = sbr.rel (0) target = $region105
    $region104: #{tpu_custom_call.1} parent=1 // pred_region
      %219 = dma.done [#allocation16], 16
    $region105: #{tpu_custom_call.1} parent=1 // pred_fallthru
      _
    // Predicated region
    $region106: #{tpu_custom_call.1} parent=1 // pred_check
      _
    $region107: #{tpu_custom_call.1} parent=1 // pred_check_branch
      %221 = sbr.rel (0) target = $region109
    $region108: #{tpu_custom_call.1} parent=1 // pred_region
      %223 = dma.done [#allocation16], 16
    $region109: #{tpu_custom_call.1} parent=1 // pred_fallthru
      _
    // Predicated region
    $region110: #{tpu_custom_call.1} parent=1 // pred_check
      _
    $region111: #{tpu_custom_call.1} parent=1 // pred_check_branch
      %225 = sbr.rel (0) target = $region113
    $region112: #{tpu_custom_call.1} parent=1 // pred_region
      %227 = dma.done [#allocation19], 16
    $region113: #{tpu_custom_call.1} parent=1 // pred_fallthru
      _
    // Predicated region
    $region114: #{tpu_custom_call.1} parent=1 // pred_check
      _
    $region115: #{tpu_custom_call.1} parent=1 // pred_check_branch
      %229 = sbr.rel (0) target = $region117
    $region116: #{tpu_custom_call.1} parent=1 // pred_region
      %231 = dma.done [#allocation19], 16
    $region117: #{tpu_custom_call.1} parent=1 // pred_fallthru
      _
    // Predicated region
    $region118: #{tpu_custom_call.1} parent=1 // pred_check
      _
    $region119: #{tpu_custom_call.1} parent=1 // pred_check_branch
      %233 = sbr.rel (0) target = $region121
    $region120: #{tpu_custom_call.1} parent=1 // pred_region
      %235 = dma.done [#allocation22], 16
    $region121: #{tpu_custom_call.1} parent=1 // pred_fallthru
      _
    // Predicated region
    $region122: #{tpu_custom_call.1} parent=1 // pred_check
      _
    $region123: #{tpu_custom_call.1} parent=1 // pred_check_branch
      %237 = sbr.rel (0) target = $region125
    $region124: #{tpu_custom_call.1} parent=1 // pred_region
      %239 = dma.done [#allocation22], 256
    $region125: #{tpu_custom_call.1} parent=1 // pred_fallthru
      _
    // Predicated region
    $region126: #{tpu_custom_call.1} parent=1 // pred_check
      _
    $region127: #{tpu_custom_call.1} parent=1 // pred_check_branch
      %241 = sbr.rel (0) target = $region129
    $region128: #{tpu_custom_call.1} parent=1 // pred_region
      %243 = dma.done [#allocation25], 16
    $region129: #{tpu_custom_call.1} parent=1 // pred_fallthru
      _
    // Predicated region
    $region130: #{tpu_custom_call.1} parent=1 // pred_check
      _
    $region131: #{tpu_custom_call.1} parent=1 // pred_check_branch
      %245 = sbr.rel (0) target = $region133
    $region132: #{tpu_custom_call.1} parent=1 // pred_region
      %247 = dma.done [#allocation25], 16
    $region133: #{tpu_custom_call.1} parent=1 // pred_fallthru
      _
    %p249 = scmp.eq.s32.totalorder 0, 0
    // Predicated region
    $region134: #{tpu_custom_call.1} parent=1 // pred_check
      %p250 = pneg %p249
    $region135: #{tpu_custom_call.1} parent=1 // pred_check_branch
      %252 = sbr.rel (%p250) target = $region137
    $region136: #{tpu_custom_call.1} parent=1 // pred_region
      %v253 = vld [vmem:[%s0] sm:$0xff]
      %v254 = vld [vmem:[%s0 + $0x8] sm:$0xff]
      %v255 = vld [vmem:[%s1] sm:$0xff]
      %v256 = vld [vmem:[%s1 + $0x8] sm:$0xff]
      %v257 = vld [vmem:[%s2] sm:$0xff]
      %v258 = vld [vmem:[%s2 + $0x8] sm:$0xff]
      %v259 = vpack.c.bf16 %v254, %v253
      %v260 = vld [vmem:[%s4] sm:$0xf]
      %v261 = vld [vmem:[%s4 + $0x4] sm:$0xf]
      %v262 = vld [vmem:[%s4 + $0x8] sm:$0xf]
      %v263 = vld [vmem:[%s4 + $0xc] sm:$0xf]
      %v264 = vld [vmem:[%s5] sm:$0x1]
      %v266 = vperm.slane %v264, 0
      %v272 = vunpack.c.l.b16 %v260
      %v273 = vunpack.c.l.b16 %v261
      %v274 = vunpack.c.l.b16 %v262
      %v275 = vunpack.c.l.b16 %v263
      %v276 = vpack.c.b16 %v273, %v272
      %v277 = vpack.c.b16 %v275, %v274
      %vm280 = vcmask 261120
      %v282 = vsel %vm280, %v259, 0
      %284 = vmatpush.bf16.msra.mxu0 0
      %285 = vmatpush.bf16.msra.mxu0 0
      %286 = vmatpush.bf16.msra.mxu0 0
      %287 = vmatpush.bf16.msra.mxu0 0
      %288 = vmatpush.bf16.msra.mxu0 0
      %289 = vmatpush.bf16.msra.mxu0 0
      %290 = vmatpush.bf16.msra.mxu0 %v277
      %291 = vmatpush.bf16.msra.mxu0 %v276
      %292 = vmatmul.bf16.gmra.mxu0 %v282
      %v293 = vpop.f32.mrf.mxu0
      %v294 = vadd.f32 %v266, %v293
      %v295 = vpop.f32.mrf.mxu0
      %v296 = vadd.f32 %v266, %v295
      %297 = vdwg.mxu0
      %v298 = vmul.f32 %v294, 0.17677669
      %v299 = vmul.f32 %v296, 0.17677669
      %v300 = vpack.c.bf16 %v298, %v298
      %v301 = vpack.c.bf16 %v299, %v299
      %v302 = vpack.c.bf16 %v256, %v255
      %v303 = vld [vmem:[%s6] sm:$0xf]
      %v304 = vld [vmem:[%s6 + $0x4] sm:$0xf]
      %v305 = vld [vmem:[%s6 + $0x8] sm:$0xf]
      %v306 = vld [vmem:[%s6 + $0xc] sm:$0xf]
      %v307 = vld [vmem:[#allocation9] sm:$0x1]
      %v309 = vperm.slane %v307, 0
      %v315 = vunpack.c.l.b16 %v303
      %v316 = vunpack.c.l.b16 %v304
      %v317 = vunpack.c.l.b16 %v305
      %v318 = vunpack.c.l.b16 %v306
      %v319 = vpack.c.b16 %v316, %v315
      %v320 = vpack.c.b16 %v318, %v317
      %v324 = vsel %vm280, %v302, 0
      %326 = vmatpush.bf16.msra.mxu0 0
      %327 = vmatpush.bf16.msra.mxu0 0
      %328 = vmatpush.bf16.msra.mxu0 0
      %329 = vmatpush.bf16.msra.mxu0 0
      %330 = vmatpush.bf16.msra.mxu0 0
      %331 = vmatpush.bf16.msra.mxu0 0
      %332 = vmatpush.bf16.msra.mxu0 %v320
      %333 = vmatpush.bf16.msra.mxu0 %v319
      %334 = vmatmul.bf16.gmra.mxu0 %v324
      %v335 = vpop.f32.mrf.mxu0
      %v336 = vadd.f32 %v309, %v335
      %v337 = vpop.f32.mrf.mxu0
      %v338 = vadd.f32 %v309, %v337
      %339 = vdwg.mxu0
      %v340 = vpack.c.bf16 %v336, %v336
      %v341 = vpack.c.bf16 %v338, %v338
      %v342 = vpack.c.bf16 %v258, %v257
      %v343 = vld [vmem:[#allocation11] sm:$0xf]
      %v344 = vld [vmem:[#allocation11 + $0x4] sm:$0xf]
      %v345 = vld [vmem:[#allocation11 + $0x8] sm:$0xf]
      %v346 = vld [vmem:[#allocation11 + $0xc] sm:$0xf]
      %v347 = vld [vmem:[#allocation12] sm:$0x1]
      %v349 = vperm.slane %v347, 0
      %v355 = vunpack.c.l.b16 %v343
      %v356 = vunpack.c.l.b16 %v344
      %v357 = vunpack.c.l.b16 %v345
      %v358 = vunpack.c.l.b16 %v346
      %v359 = vpack.c.b16 %v356, %v355
      %v360 = vpack.c.b16 %v358, %v357
      %v364 = vsel %vm280, %v342, 0
      %366 = vmatpush.bf16.msra.mxu0 0
      %367 = vmatpush.bf16.msra.mxu0 0
      %368 = vmatpush.bf16.msra.mxu0 0
      %369 = vmatpush.bf16.msra.mxu0 0
      %370 = vmatpush.bf16.msra.mxu0 0
      %371 = vmatpush.bf16.msra.mxu0 0
      %372 = vmatpush.bf16.msra.mxu0 %v360
      %373 = vmatpush.bf16.msra.mxu0 %v359
      %374 = vmatmul.bf16.gmra.mxu0 %v364
      %v375 = vpop.f32.mrf.mxu0
      %v376 = vadd.f32 %v349, %v375
      %v377 = vpop.f32.mrf.mxu0
      %v378 = vadd.f32 %v349, %v377
      %379 = vdwg.mxu0
      %v380 = vpack.c.bf16 %v376, %v376
      %v381 = vpack.c.bf16 %v378, %v378
      %v382 = vld [vmem:[#allocation6] sm:$0xff]
      %v383 = vmul.f32 %v382, -1.7677669e+08
      %vm384 = vcmask 64512
      %v386 = vsel %vm384, %v300, 0
      %v389 = vsel %vm384, %v340, 0
      %391 = vmatpush.bf16.xpose.msra.mxu0 0
      %392 = vmatpush.bf16.xpose.msra.mxu0 0
      %393 = vmatpush.bf16.xpose.msra.mxu0 0
      %394 = vmatpush.bf16.xpose.msra.mxu0 0
      %395 = vmatpush.bf16.xpose.msra.mxu0 0
      %396 = vmatpush.bf16.xpose.msra.mxu0 0
      %397 = vmatpush.bf16.xpose.msra.mxu0 0
      %398 = vmatpush.bf16.xpose.msra.mxu0 %v389
      %399 = vmatmul.bf16.gmra.mxu0 %v386
      %v400 = vpop.f32.mrf.mxu0
      %v401 = vadd.f32 %v383, %v400
      %v402 = vpop.f32.mrf.mxu0
      %403 = vdwg.mxu0
      %v405 = vsel %vm384, %v301, 0
      %v408 = vsel %vm384, %v341, 0
      %410 = vmatpush.bf16.xpose.msra.mxu0 0
      %411 = vmatpush.bf16.xpose.msra.mxu0 0
      %412 = vmatpush.bf16.xpose.msra.mxu0 0
      %413 = vmatpush.bf16.xpose.msra.mxu0 0
      %414 = vmatpush.bf16.xpose.msra.mxu0 0
      %415 = vmatpush.bf16.xpose.msra.mxu0 0
      %416 = vmatpush.bf16.xpose.msra.mxu0 0
      %417 = vmatpush.bf16.xpose.msra.mxu0 %v408
      %418 = vmatmul.bf16.gmra.mxu0 %v405
      %v419 = vpop.f32.mrf.mxu0
      %v420 = vadd.f32 %v383, %v419
      %v421 = vpop.f32.mrf.mxu0
      %422 = vdwg.mxu0
      %v423 = vsel %vm384, %v401, -inf
      %424 = vmax.xlane.f32.xlu0 %v423
      %v425 = vpop.xlane.xlu0 %424
      %v426 = vsel %vm384, %v420, -inf
      %427 = vmax.xlane.f32.xlu0 %v426
      %v428 = vpop.xlane.xlu0 %427
      %v429 = vsub.f32 %v401, %v425
      %v430 = vsub.f32 %v420, %v428
      %v431 = vmul.f32 %v429, 1.442695
      %v432 = vpow.pop %v431
      %v433 = vmul.f32 %v430, 1.442695
      %v434 = vpow.pop %v433
      %v435 = vsel %vm384, %v432, 0.0
      %436 = vadd.xlane.f32.xlu0 %v435
      %v437 = vpop.xlane.xlu0 %436
      %v438 = vsel %vm384, %v434, 0.0
      %439 = vadd.xlane.f32.xlu0 %v438
      %v440 = vpop.xlane.xlu0 %439
      %v441 = vrcp.pop %v437
      %v442 = vrcp.pop %v440
      %v443 = vmul.f32 %v432, %v441
      %v444 = vmul.f32 %v434, %v442
      %v445 = vpack.c.bf16 %v443, %v443
      %v446 = vpack.c.bf16 %v444, %v444
      %v448 = vsel %vm384, %v445, 0
      %vm450 = vcmask 1043456
      %v452 = vsel %vm450, %v380, 0
      %454 = vmatpush.bf16.msra.mxu0 0
      %455 = vmatpush.bf16.msra.mxu0 0
      %456 = vmatpush.bf16.msra.mxu0 0
      %457 = vmatpush.bf16.msra.mxu0 0
      %458 = vmatpush.bf16.msra.mxu0 0
      %459 = vmatpush.bf16.msra.mxu0 0
      %460 = vmatpush.bf16.msra.mxu0 0
      %461 = vmatpush.bf16.msra.mxu0 %v452
      %462 = vmatmul.bf16.gmra.mxu0 %v448
      %v463 = vpop.f32.mrf.mxu0
      %v464 = vadd.f32 0.0, %v463
      %v465 = vpop.f32.mrf.mxu0
      %466 = vdwg.mxu0
      %v468 = vsel %vm384, %v446, 0
      %v471 = vsel %vm450, %v381, 0
      %473 = vmatpush.bf16.msra.mxu0 0
      %474 = vmatpush.bf16.msra.mxu0 0
      %475 = vmatpush.bf16.msra.mxu0 0
      %476 = vmatpush.bf16.msra.mxu0 0
      %477 = vmatpush.bf16.msra.mxu0 0
      %478 = vmatpush.bf16.msra.mxu0 0
      %479 = vmatpush.bf16.msra.mxu0 0
      %480 = vmatpush.bf16.msra.mxu0 %v471
      %481 = vmatmul.bf16.gmra.mxu0 %v468
      %v482 = vpop.f32.mrf.mxu0
      %v483 = vadd.f32 0.0, %v482
      %v484 = vpop.f32.mrf.mxu0
      %485 = vdwg.mxu0
      %v486 = vpack.c.bf16 %v464, %v464
      %v487 = vpack.c.bf16 %v483, %v483
      %vm488 = vcmask 60416
      %489 = vst.msk [vmem:[#allocation5] sm:$0xf] %vm488, %v486
      %490 = vst.msk [vmem:[#allocation5 + $0x4] sm:$0xf] %vm488, %v487
      %v492 = vunpack.c.l.b16 %v300
      %v493 = vpack.c.b16 %v492, %v492
      %494 = vrot.lane.b32.xlu0 %v493, 120
      %v495 = vpop.permute.xlu0 %494
      %v497 = vunpack.c.l.b16 %v340
      %v498 = vpack.c.b16 %v497, %v497
      %499 = vrot.lane.b32.xlu0 %v498, 120
      %v500 = vpop.permute.xlu0 %499
      %v502 = vsel %vm384, %v495, 0
      %v505 = vsel %vm384, %v500, 0
      %507 = vmatpush.bf16.xpose.msra.mxu0 0
      %508 = vmatpush.bf16.xpose.msra.mxu0 0
      %509 = vmatpush.bf16.xpose.msra.mxu0 0
      %510 = vmatpush.bf16.xpose.msra.mxu0 0
      %511 = vmatpush.bf16.xpose.msra.mxu0 0
      %512 = vmatpush.bf16.xpose.msra.mxu0 0
      %513 = vmatpush.bf16.xpose.msra.mxu0 0
      %514 = vmatpush.bf16.xpose.msra.mxu0 %v505
      %515 = vmatmul.bf16.gmra.mxu0 %v502
      %v516 = vpop.f32.mrf.mxu0
      %v517 = vadd.f32 %v383, %v516
      %v518 = vpop.f32.mrf.mxu0
      %519 = vdwg.mxu0
      %v521 = vunpack.c.l.b16 %v301
      %v522 = vpack.c.b16 %v521, %v521
      %523 = vrot.lane.b32.xlu0 %v522, 120
      %v524 = vpop.permute.xlu0 %523
      %v526 = vunpack.c.l.b16 %v341
      %v527 = vpack.c.b16 %v526, %v526
      %528 = vrot.lane.b32.xlu0 %v527, 120
      %v529 = vpop.permute.xlu0 %528
      %v531 = vsel %vm384, %v524, 0
      %v534 = vsel %vm384, %v529, 0
      %536 = vmatpush.bf16.xpose.msra.mxu0 0
      %537 = vmatpush.bf16.xpose.msra.mxu0 0
      %538 = vmatpush.bf16.xpose.msra.mxu0 0
      %539 = vmatpush.bf16.xpose.msra.mxu0 0
      %540 = vmatpush.bf16.xpose.msra.mxu0 0
      %541 = vmatpush.bf16.xpose.msra.mxu0 0
      %542 = vmatpush.bf16.xpose.msra.mxu0 0
      %543 = vmatpush.bf16.xpose.msra.mxu0 %v534
      %544 = vmatmul.bf16.gmra.mxu0 %v531
      %v545 = vpop.f32.mrf.mxu0
      %v546 = vadd.f32 %v383, %v545
      %v547 = vpop.f32.mrf.mxu0
      %548 = vdwg.mxu0
      %v549 = vsel %vm384, %v517, -inf
      %550 = vmax.xlane.f32.xlu0 %v549
      %v551 = vpop.xlane.xlu0 %550
      %v552 = vsel %vm384, %v546, -inf
      %553 = vmax.xlane.f32.xlu0 %v552
      %v554 = vpop.xlane.xlu0 %553
      %v555 = vsub.f32 %v517, %v551
      %v556 = vsub.f32 %v546, %v554
      %v557 = vmul.f32 %v555, 1.442695
      %v558 = vpow.pop %v557
      %v559 = vmul.f32 %v556, 1.442695
      %v560 = vpow.pop %v559
      %v561 = vsel %vm384, %v558, 0.0
      %562 = vadd.xlane.f32.xlu0 %v561
      %v563 = vpop.xlane.xlu0 %562
      %v564 = vsel %vm384, %v560, 0.0
      %565 = vadd.xlane.f32.xlu0 %v564
      %v566 = vpop.xlane.xlu0 %565
      %v567 = vrcp.pop %v563
      %v568 = vrcp.pop %v566
      %v569 = vmul.f32 %v558, %v567
      %v570 = vmul.f32 %v560, %v568
      %v571 = vpack.c.bf16 %v569, %v569
      %v572 = vpack.c.bf16 %v570, %v570
      %v574 = vunpack.c.l.b16 %v380
      %v575 = vpack.c.b16 %v574, %v574
      %576 = vrot.lane.b32.xlu0 %v575, 120
      %v577 = vpop.permute.xlu0 %576
      %v579 = vsel %vm384, %v571, 0
      %v582 = vsel %vm450, %v577, 0
      %584 = vmatpush.bf16.msra.mxu0 0
      %585 = vmatpush.bf16.msra.mxu0 0
      %586 = vmatpush.bf16.msra.mxu0 0
      %587 = vmatpush.bf16.msra.mxu0 0
      %588 = vmatpush.bf16.msra.mxu0 0
      %589 = vmatpush.bf16.msra.mxu0 0
      %590 = vmatpush.bf16.msra.mxu0 0
      %591 = vmatpush.bf16.msra.mxu0 %v582
      %592 = vmatmul.bf16.gmra.mxu0 %v579
      %v593 = vpop.f32.mrf.mxu0
      %v594 = vadd.f32 0.0, %v593
      %v595 = vpop.f32.mrf.mxu0
      %596 = vdwg.mxu0
      %v598 = vunpack.c.l.b16 %v381
      %v599 = vpack.c.b16 %v598, %v598
      %600 = vrot.lane.b32.xlu0 %v599, 120
      %v601 = vpop.permute.xlu0 %600
      %v603 = vsel %vm384, %v572, 0
      %v606 = vsel %vm450, %v601, 0
      %608 = vmatpush.bf16.msra.mxu0 0
      %609 = vmatpush.bf16.msra.mxu0 0
      %610 = vmatpush.bf16.msra.mxu0 0
      %611 = vmatpush.bf16.msra.mxu0 0
      %612 = vmatpush.bf16.msra.mxu0 0
      %613 = vmatpush.bf16.msra.mxu0 0
      %614 = vmatpush.bf16.msra.mxu0 0
      %615 = vmatpush.bf16.msra.mxu0 %v606
      %616 = vmatmul.bf16.gmra.mxu0 %v603
      %v617 = vpop.f32.mrf.mxu0
      %v618 = vadd.f32 0.0, %v617
      %v619 = vpop.f32.mrf.mxu0
      %620 = vdwg.mxu0
      %v621 = vpack.c.bf16 %v594, %v594
      %v622 = vpack.c.bf16 %v618, %v618
      %625 = vrot.lane.b32.xlu0 %v621, 8
      %v626 = vpop.permute.xlu0 %625
      %627 = vrot.lane.b32.xlu0 %v622, 8
      %v628 = vpop.permute.xlu0 %627
      %vm631 = vcmask 126016
      %632 = vst.msk [vmem:[#allocation5] sm:$0xf] %vm631, %v626
      %633 = vst.msk [vmem:[#allocation5 + $0x4] sm:$0xf] %vm631, %v628
      %634 = vrot.lane.b32.xlu0 %v493, 112
      %v635 = vpop.permute.xlu0 %634
      %636 = vrot.lane.b32.xlu0 %v498, 112
      %v637 = vpop.permute.xlu0 %636
      %v639 = vsel %vm384, %v635, 0
      %v642 = vsel %vm384, %v637, 0
      %644 = vmatpush.bf16.xpose.msra.mxu0 0
      %645 = vmatpush.bf16.xpose.msra.mxu0 0
      %646 = vmatpush.bf16.xpose.msra.mxu0 0
      %647 = vmatpush.bf16.xpose.msra.mxu0 0
      %648 = vmatpush.bf16.xpose.msra.mxu0 0
      %649 = vmatpush.bf16.xpose.msra.mxu0 0
      %650 = vmatpush.bf16.xpose.msra.mxu0 0
      %651 = vmatpush.bf16.xpose.msra.mxu0 %v642
      %652 = vmatmul.bf16.gmra.mxu0 %v639
      %v653 = vpop.f32.mrf.mxu0
      %v654 = vadd.f32 %v383, %v653
      %v655 = vpop.f32.mrf.mxu0
      %656 = vdwg.mxu0
      %657 = vrot.lane.b32.xlu0 %v522, 112
      %v658 = vpop.permute.xlu0 %657
      %659 = vrot.lane.b32.xlu0 %v527, 112
      %v660 = vpop.permute.xlu0 %659
      %v662 = vsel %vm384, %v658, 0
      %v665 = vsel %vm384, %v660, 0
      %667 = vmatpush.bf16.xpose.msra.mxu0 0
      %668 = vmatpush.bf16.xpose.msra.mxu0 0
      %669 = vmatpush.bf16.xpose.msra.mxu0 0
      %670 = vmatpush.bf16.xpose.msra.mxu0 0
      %671 = vmatpush.bf16.xpose.msra.mxu0 0
      %672 = vmatpush.bf16.xpose.msra.mxu0 0
      %673 = vmatpush.bf16.xpose.msra.mxu0 0
      %674 = vmatpush.bf16.xpose.msra.mxu0 %v665
      %675 = vmatmul.bf16.gmra.mxu0 %v662
      %v676 = vpop.f32.mrf.mxu0
      %v677 = vadd.f32 %v383, %v676
      %v678 = vpop.f32.mrf.mxu0
      %679 = vdwg.mxu0
      %v680 = vsel %vm384, %v654, -inf
      %681 = vmax.xlane.f32.xlu0 %v680
      %v682 = vpop.xlane.xlu0 %681
      %v683 = vsel %vm384, %v677, -inf
      %684 = vmax.xlane.f32.xlu0 %v683
      %v685 = vpop.xlane.xlu0 %684
      %v686 = vsub.f32 %v654, %v682
      %v687 = vsub.f32 %v677, %v685
      %v688 = vmul.f32 %v686, 1.442695
      %v689 = vpow.pop %v688
      %v690 = vmul.f32 %v687, 1.442695
      %v691 = vpow.pop %v690
      %v692 = vsel %vm384, %v689, 0.0
      %693 = vadd.xlane.f32.xlu0 %v692
      %v694 = vpop.xlane.xlu0 %693
      %v695 = vsel %vm384, %v691, 0.0
      %696 = vadd.xlane.f32.xlu0 %v695
      %v697 = vpop.xlane.xlu0 %696
      %v698 = vrcp.pop %v694
      %v699 = vrcp.pop %v697
      %v700 = vmul.f32 %v689, %v698
      %v701 = vmul.f32 %v691, %v699
      %v702 = vpack.c.bf16 %v700, %v700
      %v703 = vpack.c.bf16 %v701, %v701
      %704 = vrot.lane.b32.xlu0 %v575, 112
      %v705 = vpop.permute.xlu0 %704
      %v707 = vsel %vm384, %v702, 0
      %v710 = vsel %vm450, %v705, 0
      %712 = vmatpush.bf16.msra.mxu0 0
      %713 = vmatpush.bf16.msra.mxu0 0
      %714 = vmatpush.bf16.msra.mxu0 0
      %715 = vmatpush.bf16.msra.mxu0 0
      %716 = vmatpush.bf16.msra.mxu0 0
      %717 = vmatpush.bf16.msra.mxu0 0
      %718 = vmatpush.bf16.msra.mxu0 0
      %719 = vmatpush.bf16.msra.mxu0 %v710
      %720 = vmatmul.bf16.gmra.mxu0 %v707
      %v721 = vpop.f32.mrf.mxu0
      %v722 = vadd.f32 0.0, %v721
      %v723 = vpop.f32.mrf.mxu0
      %724 = vdwg.mxu0
      %725 = vrot.lane.b32.xlu0 %v599, 112
      %v726 = vpop.permute.xlu0 %725
      %v728 = vsel %vm384, %v703, 0
      %v731 = vsel %vm450, %v726, 0
      %733 = vmatpush.bf16.msra.mxu0 0
      %734 = vmatpush.bf16.msra.mxu0 0
      %735 = vmatpush.bf16.msra.mxu0 0
      %736 = vmatpush.bf16.msra.mxu0 0
      %737 = vmatpush.bf16.msra.mxu0 0
      %738 = vmatpush.bf16.msra.mxu0 0
      %739 = vmatpush.bf16.msra.mxu0 0
      %740 = vmatpush.bf16.msra.mxu0 %v731
      %741 = vmatmul.bf16.gmra.mxu0 %v728
      %v742 = vpop.f32.mrf.mxu0
      %v743 = vadd.f32 0.0, %v742
      %v744 = vpop.f32.mrf.mxu0
      %745 = vdwg.mxu0
      %v746 = vpack.c.bf16 %v722, %v722
      %v747 = vpack.c.bf16 %v743, %v743
      %750 = vrot.lane.b32.xlu0 %v746, 16
      %v751 = vpop.permute.xlu0 %750
      %752 = vrot.lane.b32.xlu0 %v747, 16
      %v753 = vpop.permute.xlu0 %752
      %vm756 = vcmask 191616
      %757 = vst.msk [vmem:[#allocation5] sm:$0xf] %vm756, %v751
      %758 = vst.msk [vmem:[#allocation5 + $0x4] sm:$0xf] %vm756, %v753
      %759 = vrot.lane.b32.xlu0 %v493, 104
      %v760 = vpop.permute.xlu0 %759
      %761 = vrot.lane.b32.xlu0 %v498, 104
      %v762 = vpop.permute.xlu0 %761
      %v764 = vsel %vm384, %v760, 0
      %v767 = vsel %vm384, %v762, 0
      %769 = vmatpush.bf16.xpose.msra.mxu0 0
      %770 = vmatpush.bf16.xpose.msra.mxu0 0
      %771 = vmatpush.bf16.xpose.msra.mxu0 0
      %772 = vmatpush.bf16.xpose.msra.mxu0 0
      %773 = vmatpush.bf16.xpose.msra.mxu0 0
      %774 = vmatpush.bf16.xpose.msra.mxu0 0
      %775 = vmatpush.bf16.xpose.msra.mxu0 0
      %776 = vmatpush.bf16.xpose.msra.mxu0 %v767
      %777 = vmatmul.bf16.gmra.mxu0 %v764
      %v778 = vpop.f32.mrf.mxu0
      %v779 = vadd.f32 %v383, %v778
      %v780 = vpop.f32.mrf.mxu0
      %781 = vdwg.mxu0
      %782 = vrot.lane.b32.xlu0 %v522, 104
      %v783 = vpop.permute.xlu0 %782
      %784 = vrot.lane.b32.xlu0 %v527, 104
      %v785 = vpop.permute.xlu0 %784
      %v787 = vsel %vm384, %v783, 0
      %v790 = vsel %vm384, %v785, 0
      %792 = vmatpush.bf16.xpose.msra.mxu0 0
      %793 = vmatpush.bf16.xpose.msra.mxu0 0
      %794 = vmatpush.bf16.xpose.msra.mxu0 0
      %795 = vmatpush.bf16.xpose.msra.mxu0 0
      %796 = vmatpush.bf16.xpose.msra.mxu0 0
      %797 = vmatpush.bf16.xpose.msra.mxu0 0
      %798 = vmatpush.bf16.xpose.msra.mxu0 0
      %799 = vmatpush.bf16.xpose.msra.mxu0 %v790
      %800 = vmatmul.bf16.gmra.mxu0 %v787
      %v801 = vpop.f32.mrf.mxu0
      %v802 = vadd.f32 %v383, %v801
      %v803 = vpop.f32.mrf.mxu0
      %804 = vdwg.mxu0
      %v805 = vsel %vm384, %v779, -inf
      %806 = vmax.xlane.f32.xlu0 %v805
      %v807 = vpop.xlane.xlu0 %806
      %v808 = vsel %vm384, %v802, -inf
      %809 = vmax.xlane.f32.xlu0 %v808
      %v810 = vpop.xlane.xlu0 %809
      %v811 = vsub.f32 %v779, %v807
      %v812 = vsub.f32 %v802, %v810
      %v813 = vmul.f32 %v811, 1.442695
      %v814 = vpow.pop %v813
      %v815 = vmul.f32 %v812, 1.442695
      %v816 = vpow.pop %v815
      %v817 = vsel %vm384, %v814, 0.0
      %818 = vadd.xlane.f32.xlu0 %v817
      %v819 = vpop.xlane.xlu0 %818
      %v820 = vsel %vm384, %v816, 0.0
      %821 = vadd.xlane.f32.xlu0 %v820
      %v822 = vpop.xlane.xlu0 %821
      %v823 = vrcp.pop %v819
      %v824 = vrcp.pop %v822
      %v825 = vmul.f32 %v814, %v823
      %v826 = vmul.f32 %v816, %v824
      %v827 = vpack.c.bf16 %v825, %v825
      %v828 = vpack.c.bf16 %v826, %v826
      %829 = vrot.lane.b32.xlu0 %v575, 104
      %v830 = vpop.permute.xlu0 %829
      %v832 = vsel %vm384, %v827, 0
      %v835 = vsel %vm450, %v830, 0
      %837 = vmatpush.bf16.msra.mxu0 0
      %838 = vmatpush.bf16.msra.mxu0 0
      %839 = vmatpush.bf16.msra.mxu0 0
      %840 = vmatpush.bf16.msra.mxu0 0
      %841 = vmatpush.bf16.msra.mxu0 0
      %842 = vmatpush.bf16.msra.mxu0 0
      %843 = vmatpush.bf16.msra.mxu0 0
      %844 = vmatpush.bf16.msra.mxu0 %v835
      %845 = vmatmul.bf16.gmra.mxu0 %v832
      %v846 = vpop.f32.mrf.mxu0
      %v847 = vadd.f32 0.0, %v846
      %v848 = vpop.f32.mrf.mxu0
      %849 = vdwg.mxu0
      %850 = vrot.lane.b32.xlu0 %v599, 104
      %v851 = vpop.permute.xlu0 %850
      %v853 = vsel %vm384, %v828, 0
      %v856 = vsel %vm450, %v851, 0
      %858 = vmatpush.bf16.msra.mxu0 0
      %859 = vmatpush.bf16.msra.mxu0 0
      %860 = vmatpush.bf16.msra.mxu0 0
      %861 = vmatpush.bf16.msra.mxu0 0
      %862 = vmatpush.bf16.msra.mxu0 0
      %863 = vmatpush.bf16.msra.mxu0 0
      %864 = vmatpush.bf16.msra.mxu0 0
      %865 = vmatpush.bf16.msra.mxu0 %v856
      %866 = vmatmul.bf16.gmra.mxu0 %v853
      %v867 = vpop.f32.mrf.mxu0
      %v868 = vadd.f32 0.0, %v867
      %v869 = vpop.f32.mrf.mxu0
      %870 = vdwg.mxu0
      %v871 = vpack.c.bf16 %v847, %v847
      %v872 = vpack.c.bf16 %v868, %v868
      %875 = vrot.lane.b32.xlu0 %v871, 24
      %v876 = vpop.permute.xlu0 %875
      %877 = vrot.lane.b32.xlu0 %v872, 24
      %v878 = vpop.permute.xlu0 %877
      %vm881 = vcmask 257216
      %882 = vst.msk [vmem:[#allocation5] sm:$0xf] %vm881, %v876
      %883 = vst.msk [vmem:[#allocation5 + $0x4] sm:$0xf] %vm881, %v878
      %v884 = vld [vmem:[#allocation5] sm:$0xf]
      %v885 = vld [vmem:[#allocation5 + $0x4] sm:$0xf]
      %v886 = vld [vmem:[#allocation14] sm:$0xf]
      %v887 = vld [vmem:[#allocation14 + $0x4] sm:$0xf]
      %v888 = vld [vmem:[#allocation14 + $0x8] sm:$0xf]
      %v889 = vld [vmem:[#allocation14 + $0xc] sm:$0xf]
      %v890 = vld [vmem:[#allocation15] sm:$0x1]
      %v891 = vld [vmem:[#allocation17] sm:$0x1]
      %v892 = vld [vmem:[#allocation18] sm:$0x1]
      %v894 = vperm.slane %v890, 0
      %v898 = vunpack.c.l.b16 %v884
      %v899 = vunpack.c.l.b16 %v885
      %v900 = vpack.c.b16 %v899, %v898
      %v905 = vunpack.c.l.b16 %v886
      %v906 = vunpack.c.l.b16 %v887
      %v907 = vunpack.c.l.b16 %v888
      %v908 = vunpack.c.l.b16 %v889
      %v909 = vpack.c.b16 %v906, %v905
      %v910 = vpack.c.b16 %v908, %v907
      %v914 = vsel %vm280, %v900, 0
      %916 = vmatpush.bf16.msra.mxu0 0
      %917 = vmatpush.bf16.msra.mxu0 0
      %918 = vmatpush.bf16.msra.mxu0 0
      %919 = vmatpush.bf16.msra.mxu0 0
      %920 = vmatpush.bf16.msra.mxu0 0
      %921 = vmatpush.bf16.msra.mxu0 0
      %922 = vmatpush.bf16.msra.mxu0 %v910
      %923 = vmatpush.bf16.msra.mxu0 %v909
      %924 = vmatmul.bf16.gmra.mxu0 %v914
      %v925 = vpop.f32.mrf.mxu0
      %v926 = vadd.f32 %v894, %v925
      %v927 = vpop.f32.mrf.mxu0
      %v928 = vadd.f32 %v894, %v927
      %929 = vdwg.mxu0
      %v930 = vadd.f32 %v926, %v253
      %v931 = vadd.f32 %v928, %v254
      %v932 = vsel %vm280, %v930, 0.0
      %933 = vadd.xlane.f32.xlu0 %v932
      %v934 = vpop.xlane.xlu0 %933
      %v935 = vsel %vm280, %v931, 0.0
      %936 = vadd.xlane.f32.xlu0 %v935
      %v937 = vpop.xlane.xlu0 %936
      %v938 = vrcp.pop 32.0
      %v939 = vmul.f32 32.0, %v938
      %v940 = vsub.f32 1.0, %v939
      %v941 = vmul.f32 %v938, %v940
      %v942 = vadd.f32 %v938, %v941
      %vm943 = vweird.f32 %v938
      %v944 = vsel %vm943, %v938, %v942
      %v945 = vmul.f32 %v934, %v944
      %v946 = vmul.f32 %v937, %v944
      %v947 = vsub.f32 %v930, %v945
      %v948 = vsub.f32 %v931, %v946
      %v949 = vmul.f32 %v947, %v947
      %v950 = vmul.f32 %v948, %v948
      %v951 = vsel %vm280, %v949, 0.0
      %952 = vadd.xlane.f32.xlu0 %v951
      %v953 = vpop.xlane.xlu0 %952
      %v954 = vsel %vm280, %v950, 0.0
      %955 = vadd.xlane.f32.xlu0 %v954
      %v956 = vpop.xlane.xlu0 %955
      %v957 = vmul.f32 %v953, %v944
      %v958 = vmul.f32 %v956, %v944
      %v959 = vadd.f32 %v957, 1e-05
      %v960 = vadd.f32 %v958, 1e-05
      %v961 = vrsqrt.pop %v959
      %v962 = vmul.f32 %v961, %v959
      %v963 = vmul.f32 %v962, %v961
      %v964 = vmul.f32 0.5, %v963
      %v965 = vsub.f32 1.5, %v964
      %v966 = vmul.f32 %v961, %v965
      %vm967 = vweird.f32 %v959
      %vm968 = vweird.f32 %v961
      %vm969 = vmor %vm967, %vm968
      %v970 = vsel %vm969, %v961, %v966
      %v971 = vrsqrt.pop %v960
      %v972 = vmul.f32 %v971, %v960
      %v973 = vmul.f32 %v972, %v971
      %v974 = vmul.f32 0.5, %v973
      %v975 = vsub.f32 1.5, %v974
      %v976 = vmul.f32 %v971, %v975
      %vm977 = vweird.f32 %v960
      %vm978 = vweird.f32 %v971
      %vm979 = vmor %vm977, %vm978
      %v980 = vsel %vm979, %v971, %v976
      %v981 = vmul.f32 %v947, %v970
      %v982 = vmul.f32 %v948, %v980
      %v984 = vperm.slane %v891, 0
      %v986 = vmul.f32 %v981, %v984
      %v987 = vmul.f32 %v982, %v984
      %v989 = vperm.slane %v892, 0
      %v991 = vadd.f32 %v986, %v989
      %v992 = vadd.f32 %v987, %v989
      %993 = vst.msk [vmem:[#allocation2] sm:$0xff] %vm280, %v991
      %994 = vst.msk [vmem:[#allocation2 + $0x8] sm:$0xff] %vm280, %v992
      %v995 = vpack.c.bf16 %v991, %v991
      %v996 = vpack.c.bf16 %v992, %v992
      %vm997 = vcmask 257024
      %998 = vst.msk [vmem:[#allocation3] sm:$0xf] %vm997, %v995
      %999 = vst.msk [vmem:[#allocation3 + $0x4] sm:$0xf] %vm997, %v996
    $region137: #{tpu_custom_call.1} parent=1 // pred_fallthru
      _
    %v1000 = vld [vmem:[#allocation3] sm:$0xf]
    %v1001 = vld [vmem:[#allocation3 + $0x4] sm:$0xf]
    %v1002 = vld [vmem:[#allocation23] sm:$0xf]
    %v1003 = vld [vmem:[#allocation23 + $0x4] sm:$0xf]
    %v1004 = vld [vmem:[#allocation23 + $0x8] sm:$0xf]
    %v1005 = vld [vmem:[#allocation23 + $0xc] sm:$0xf]
    %v1006 = vld [vmem:[#allocation24] sm:$0x1]
    %v1008 = vperm.slane %v1006, 0
    %v1012 = vunpack.c.l.b16 %v1000
    %v1013 = vunpack.c.l.b16 %v1001
    %v1014 = vpack.c.b16 %v1013, %v1012
    %v1019 = vunpack.c.l.b16 %v1002
    %v1020 = vunpack.c.l.b16 %v1003
    %v1021 = vunpack.c.l.b16 %v1004
    %v1022 = vunpack.c.l.b16 %v1005
    %v1023 = vpack.c.b16 %v1020, %v1019
    %v1024 = vpack.c.b16 %v1022, %v1021
    %vm1027 = vcmask 261120
    %v1029 = vsel %vm1027, %v1014, 0
    %1031 = vmatpush.bf16.msra.mxu0 0
    %1032 = vmatpush.bf16.msra.mxu0 0
    %1033 = vmatpush.bf16.msra.mxu0 0
    %1034 = vmatpush.bf16.msra.mxu0 0
    %1035 = vmatpush.bf16.msra.mxu0 0
    %1036 = vmatpush.bf16.msra.mxu0 0
    %1037 = vmatpush.bf16.msra.mxu0 %v1024
    %1038 = vmatpush.bf16.msra.mxu0 %v1023
    %1039 = vmatmul.bf16.gmra.mxu0 %v1029
    %v1040 = vpop.f32.mrf.mxu0
    %v1041 = vadd.f32 %v1008, %v1040
    %v1042 = vpop.f32.mrf.mxu0
    %v1043 = vadd.f32 %v1008, %v1042
    %1044 = vdwg.mxu0
    %v1045 = vmax.f32 %v1041, 0.0
    %v1046 = vmax.f32 %v1043, 0.0
    %v1047 = vpack.c.bf16 %v1046, %v1045
    %v1048 = vld [vmem:[%s18] sm:$0xf]
    %v1049 = vld [vmem:[%s18 + $0x4] sm:$0xf]
    %v1050 = vld [vmem:[%s18 + $0x8] sm:$0xf]
    %v1051 = vld [vmem:[%s18 + $0xc] sm:$0xf]
    %v1052 = vld [vmem:[%s18 + $0x10] sm:$0xf]
    %v1053 = vld [vmem:[%s18 + $0x14] sm:$0xf]
    %v1054 = vld [vmem:[%s18 + $0x18] sm:$0xf]
    %v1055 = vld [vmem:[%s18 + $0x1c] sm:$0xf]
    %v1056 = vld [vmem:[%s18 + $0x20] sm:$0xf]
    %v1057 = vld [vmem:[%s18 + $0x24] sm:$0xf]
    %v1058 = vld [vmem:[%s18 + $0x28] sm:$0xf]
    %v1059 = vld [vmem:[%s18 + $0x2c] sm:$0xf]
    %v1060 = vld [vmem:[%s18 + $0x30] sm:$0xf]
    %v1061 = vld [vmem:[%s18 + $0x34] sm:$0xf]
    %v1062 = vld [vmem:[%s18 + $0x38] sm:$0xf]
    %v1063 = vld [vmem:[%s18 + $0x3c] sm:$0xf]
    %v1080 = vunpack.c.l.b16 %v1048
    %v1081 = vunpack.c.l.b16 %v1049
    %v1082 = vunpack.c.l.b16 %v1050
    %v1083 = vunpack.c.l.b16 %v1051
    %v1084 = vunpack.c.l.b16 %v1052
    %v1085 = vunpack.c.l.b16 %v1053
    %v1086 = vunpack.c.l.b16 %v1054
    %v1087 = vunpack.c.l.b16 %v1055
    %v1088 = vunpack.c.l.b16 %v1056
    %v1089 = vunpack.c.l.b16 %v1057
    %v1090 = vunpack.c.l.b16 %v1058
    %v1091 = vunpack.c.l.b16 %v1059
    %v1092 = vunpack.c.l.b16 %v1060
    %v1093 = vunpack.c.l.b16 %v1061
    %v1094 = vunpack.c.l.b16 %v1062
    %v1095 = vunpack.c.l.b16 %v1063
    %v1096 = vpack.c.b16 %v1081, %v1080
    %v1097 = vpack.c.b16 %v1083, %v1082
    %v1098 = vpack.c.b16 %v1085, %v1084
    %v1099 = vpack.c.b16 %v1087, %v1086
    %v1100 = vpack.c.b16 %v1089, %v1088
    %v1101 = vpack.c.b16 %v1091, %v1090
    %v1102 = vpack.c.b16 %v1093, %v1092
    %v1103 = vpack.c.b16 %v1095, %v1094
    %1112 = vmatpush.bf16.msra.mxu0 %v1103
    %1113 = vmatpush.bf16.msra.mxu0 %v1102
    %1114 = vmatpush.bf16.msra.mxu0 %v1101
    %1115 = vmatpush.bf16.msra.mxu0 %v1100
    %1116 = vmatpush.bf16.msra.mxu0 %v1099
    %1117 = vmatpush.bf16.msra.mxu0 %v1098
    %1118 = vmatpush.bf16.msra.mxu0 %v1097
    %1119 = vmatpush.bf16.msra.mxu0 %v1096
    %1120 = vmatmul.bf16.gmra.mxu0 %v1047
    %v1121 = vpop.f32.mrf.mxu0
    %v1122 = vadd.f32 0.0, %v1121
    %v1123 = vpop.f32.mrf.mxu0
    %v1124 = vadd.f32 0.0, %v1123
    %1125 = vdwg.mxu0
    // Predicated region
    $region138: #{tpu_custom_call.1} parent=1 // pred_check
      %p1126 = pneg %p249
    $region139: #{tpu_custom_call.1} parent=1 // pred_check_branch
      %1128 = sbr.rel (%p1126) target = $region141
    $region140: #{tpu_custom_call.1} parent=1 // pred_region
      %1129 = vst.msk [vmem:[#allocation4] sm:$0xff] %vm1027, %v1122
      %1130 = vst.msk [vmem:[#allocation4 + $0x8] sm:$0xff] %vm1027, %v1124
    $region141: #{tpu_custom_call.1} parent=1 // pred_fallthru
      _
    %p1131 = scmp.gt.s32.totalorder 0, 0
    // Predicated region
    $region142: #{tpu_custom_call.1} parent=1 // pred_check
      %p1132 = pneg %p1131
    $region143: #{tpu_custom_call.1} parent=1 // pred_check_branch
      %1134 = sbr.rel (%p1132) target = $region145
    $region144: #{tpu_custom_call.1} parent=1 // pred_region
      %v1135 = vld [vmem:[#allocation4] sm:$0xff]
      %v1136 = vld [vmem:[#allocation4 + $0x8] sm:$0xff]
      %v1137 = vadd.f32 %v1135, %v1122
      %v1138 = vadd.f32 %v1136, %v1124
      %1139 = vst.msk [vmem:[#allocation4] sm:$0xff] %vm1027, %v1137
      %1140 = vst.msk [vmem:[#allocation4 + $0x8] sm:$0xff] %vm1027, %v1138
    $region145: #{tpu_custom_call.1} parent=1 // pred_fallthru
      _
    // Predicated region
    $region146: #{tpu_custom_call.1} parent=1 // pred_check
      %p1141 = pneg %p249
    $region147: #{tpu_custom_call.1} parent=1 // pred_check_branch
      %1143 = sbr.rel (%p1141) target = $region149
    $region148: #{tpu_custom_call.1} parent=1 // pred_region
      %v1144 = vld [vmem:[#allocation20] sm:$0x1]
      %v1145 = vld [vmem:[#allocation21] sm:$0x1]
      %v1146 = vld [vmem:[#allocation4] sm:$0xff]
      %v1147 = vld [vmem:[#allocation4 + $0x8] sm:$0xff]
      %v1148 = vld [vmem:[#allocation26] sm:$0x1]
      %v1150 = vperm.slane %v1148, 0
      %v1152 = vadd.f32 %v1146, %v1150
      %v1153 = vadd.f32 %v1147, %v1150
      %v1154 = vld [vmem:[#allocation2] sm:$0xff]
      %v1155 = vld [vmem:[#allocation2 + $0x8] sm:$0xff]
      %v1156 = vadd.f32 %v1152, %v1154
      %v1157 = vadd.f32 %v1153, %v1155
      %v1158 = vsel %vm1027, %v1156, 0.0
      %1159 = vadd.xlane.f32.xlu0 %v1158
      %v1160 = vpop.xlane.xlu0 %1159
      %v1161 = vsel %vm1027, %v1157, 0.0
      %1162 = vadd.xlane.f32.xlu0 %v1161
      %v1163 = vpop.xlane.xlu0 %1162
      %v1164 = vrcp.pop 32.0
      %v1165 = vmul.f32 32.0, %v1164
      %v1166 = vsub.f32 1.0, %v1165
      %v1167 = vmul.f32 %v1164, %v1166
      %v1168 = vadd.f32 %v1164, %v1167
      %vm1169 = vweird.f32 %v1164
      %v1170 = vsel %vm1169, %v1164, %v1168
      %v1171 = vmul.f32 %v1160, %v1170
      %v1172 = vmul.f32 %v1163, %v1170
      %v1173 = vsub.f32 %v1156, %v1171
      %v1174 = vsub.f32 %v1157, %v1172
      %v1175 = vmul.f32 %v1173, %v1173
      %v1176 = vmul.f32 %v1174, %v1174
      %v1177 = vsel %vm1027, %v1175, 0.0
      %1178 = vadd.xlane.f32.xlu0 %v1177
      %v1179 = vpop.xlane.xlu0 %1178
      %v1180 = vsel %vm1027, %v1176, 0.0
      %1181 = vadd.xlane.f32.xlu0 %v1180
      %v1182 = vpop.xlane.xlu0 %1181
      %v1183 = vmul.f32 %v1179, %v1170
      %v1184 = vmul.f32 %v1182, %v1170
      %v1185 = vadd.f32 %v1183, 1e-05
      %v1186 = vadd.f32 %v1184, 1e-05
      %v1187 = vrsqrt.pop %v1185
      %v1188 = vmul.f32 %v1187, %v1185
      %v1189 = vmul.f32 %v1188, %v1187
      %v1190 = vmul.f32 0.5, %v1189
      %v1191 = vsub.f32 1.5, %v1190
      %v1192 = vmul.f32 %v1187, %v1191
      %vm1193 = vweird.f32 %v1185
      %vm1194 = vweird.f32 %v1187
      %vm1195 = vmor %vm1193, %vm1194
      %v1196 = vsel %vm1195, %v1187, %v1192
      %v1197 = vrsqrt.pop %v1186
      %v1198 = vmul.f32 %v1197, %v1186
      %v1199 = vmul.f32 %v1198, %v1197
      %v1200 = vmul.f32 0.5, %v1199
      %v1201 = vsub.f32 1.5, %v1200
      %v1202 = vmul.f32 %v1197, %v1201
      %vm1203 = vweird.f32 %v1186
      %vm1204 = vweird.f32 %v1197
      %vm1205 = vmor %vm1203, %vm1204
      %v1206 = vsel %vm1205, %v1197, %v1202
      %v1207 = vmul.f32 %v1173, %v1196
      %v1208 = vmul.f32 %v1174, %v1206
      %v1210 = vperm.slane %v1144, 0
      %v1212 = vmul.f32 %v1207, %v1210
      %v1213 = vmul.f32 %v1208, %v1210
      %v1215 = vperm.slane %v1145, 0
      %v1217 = vadd.f32 %v1212, %v1215
      %v1218 = vadd.f32 %v1213, %v1215
      %1219 = vst.msk [vmem:[#allocation27] sm:$0xff] %vm1027, %v1217
      %1220 = vst.msk [vmem:[#allocation27 + $0x8] sm:$0xff] %vm1027, %v1218
    $region149: #{tpu_custom_call.1} parent=1 // pred_fallthru
      _
    // Predicated region
    $region150: #{tpu_custom_call.1} parent=1 // pred_check
      _
    $region151: #{tpu_custom_call.1} parent=1 // pred_check_branch
      %1222 = sbr.rel (0) target = $region153
    $region152: #{tpu_custom_call.1} parent=1 // pred_region
      %1224 = vsyncadd [#allocation8], 0
      %s1225 = sshll.u32 [#allocation27], 4
      %s1226 = int_to_ptr.vmem [resolvable:$true] %s1225
      %s1227 = sshll.u32 %s20, 4
      %s1228 = int_to_ptr.hbm [resolvable:$true] %s1227
      %1233 = dma.vmem_to_hbm [thread:$0]  %s1226, 256, %s1228, [#allocation8], 128, 128, 8
    $region153: #{tpu_custom_call.1} parent=1 // pred_fallthru
      _
    // Predicated region
    $region154: #{tpu_custom_call.1} parent=1 // pred_check
      _
    $region155: #{tpu_custom_call.1} parent=1 // pred_check_branch
      %1235 = sbr.rel (0) target = $region157
    $region156: #{tpu_custom_call.1} parent=1 // pred_region
      %1237 = dma.done [#allocation8], 256
    $region157: #{tpu_custom_call.1} parent=1 // pred_fallthru
      _
    %1238 = vsyncpa [#allocation7], 1
    %1239 = vsyncpa [#allocation10], 1
    %1240 = vsyncpa [#allocation13], 1
    %1241 = vsyncpa [#allocation16], 1
    %1242 = vsyncpa [#allocation19], 1
    %1243 = vsyncpa [#allocation22], 1
    %1244 = vsyncpa [#allocation25], 1
    %1245 = vsyncpa [#allocation8], 1

</llo_original>
